<compile_context>
chip_gen: v5e
topology: v5e:2x2
jax: 0.10.0
libtpu: 0.0.40
codegen_flags: <defaults>
</compile_context>

<pallas_src>
import math

import jax
import jax.numpy as jnp
from jax.experimental import pallas as pl
from jax.experimental.pallas import tpu as pltpu

NUM_LAYERS = 4
HIDDEN = 64
NODE_DIM = 58
EDGE_DIM = 6
NODE_PAD = 64        # 58 -> 64 (8-friendly K dim, zero pad -> numerically exact)
EDGE_PAD = 8         # 6  -> 8
LN_EPS = 1e-5
OUT_LANES = 128      # lane-dense logit store


def _graphs_per_step(B, N):
    """Pack as many graphs per grid step as keeps the block-diag adjacency <=128 rows,
    while leaving >=2 grid steps when possible (megacore / v7x dual TC)."""
    G = max(1, min(B, 128 // max(N, 1)))
    while G > 1 and (B % G != 0 or (B // G) < 2):
        G -= 1
    return G


def _make_gcn_kernel(G, N):
    inv_h = 1.0 / HIDDEN

    def kernel(x_ref, adj_ref, e_ref, wn_ref, wl_ref, g_ref, b_ref, wo_ref, we_ref,
               out_ref, eemb_ref):
        # --- fused edge embedding (independent of the GCN loop; hides under its latency)
        eemb_ref[...] = jnp.dot(e_ref[...], we_ref[...],
                                preferred_element_type=jnp.float32)

        adj = adj_ref[...]                                                  # [GN, GN] bf16
        # --- node embedding (Linear, bias=False)
        h = jnp.dot(x_ref[...], wn_ref[...],
                    preferred_element_type=jnp.float32)                     # [GN, H] f32
        h_bf = h.astype(jnp.bfloat16)     # single resident bf16 copy for the A@h operand

        # --- message-passing layers (GraphConv); block-diag A => all graphs at once
        for i in range(NUM_LAYERS):
            u_ = jnp.dot(adj, h_bf, preferred_element_type=jnp.float32)    # [GN, H]
            z = jnp.maximum(
                jnp.dot(u_.astype(jnp.bfloat16), wl_ref[i],
                        preferred_element_type=jnp.float32), 0.0) + h
            # two-pass LayerNorm (f32)
            mu = jnp.sum(z, axis=-1, keepdims=True) * inv_h
            d = z - mu
            var = jnp.sum(d * d, axis=-1, keepdims=True) * inv_h
            h = d * jax.lax.rsqrt(var + LN_EPS) * g_ref[i] + b_ref[i]
            h_bf = h.astype(jnp.bfloat16)
            # dropout(training=False) -> identity

        # --- readout 'sum' per graph, linear_out on the VPU, sigmoid, lane-dense store
        pooled = jnp.concatenate(
            [jnp.sum(h[g * N:(g + 1) * N, :], axis=0, keepdims=True)
             for g in range(G)], axis=0)                                    # [G, H]
        logit = jnp.sum(pooled * wo_ref[...], axis=-1, keepdims=True)       # [G, 1]
        out_ref[0] = jnp.broadcast_to(jax.nn.sigmoid(logit), (G, OUT_LANES))

    return kernel


def _nbytes(shape, dtype):
    return math.prod(shape) * jnp.dtype(dtype).itemsize


# --------------------------------------------------------------------------------------
# Wrapper
# --------------------------------------------------------------------------------------
def gcn_gat_model(x, e_feat, adj, w_node, w_edge, w_layers, gammas, betas, w_out):
    """x: [B,N,58] f32, e_feat: [B,E,6] f32, adj: [B,N,N] f32 (A[dst,src] counts),
    w_node: [58,H], w_edge: [6,H], w_layers: [L,H,H], gammas/betas: [L,1,H],
    w_out: [1,H].  Returns (out [B,1,1] f32, e_emb [B,E,H] f32)."""
    B, N, _ = x.shape
    E = e_feat.shape[1]

    G = _graphs_per_step(B, N)       # graphs packed per grid step
    C = B // G                       # grid steps
    GN, GE = G * N, G * E

    # wrapper-side layout prep: zero-pad K dims, cast heavy matmul operands to bf16,
    # flatten batch into node/edge slabs, build per-chunk block-diagonal adjacency.
    x_p = jnp.pad(x, ((0, 0), (0, 0), (0, NODE_PAD - NODE_DIM)))
    x_p = x_p.reshape(B * N, NODE_PAD).astype(jnp.bfloat16)
    wn_p = jnp.pad(w_node, ((0, NODE_PAD - NODE_DIM), (0, 0))).astype(jnp.bfloat16)
    e_p = jnp.pad(e_feat, ((0, 0), (0, 0), (0, EDGE_PAD - EDGE_DIM)))
    e_p = e_p.reshape(B * E, EDGE_PAD).astype(jnp.bfloat16)
    we_p = jnp.pad(w_edge, ((0, EDGE_PAD - EDGE_DIM), (0, 0))).astype(jnp.bfloat16)
    wl_bf = w_layers.astype(jnp.bfloat16)

    eye = jnp.eye(G, dtype=adj.dtype)
    adj_bd = jnp.einsum('gq,cgnm->cgnqm', eye, adj.reshape(C, G, N, N))
    adj_bd = adj_bd.reshape(C * GN, GN).astype(jnp.bfloat16)   # integer counts: exact

    # VMEM budget from actual block sizes (x2 double-buffering) + headroom for temporaries.
    block_bytes = (
        _nbytes((GN, NODE_PAD), jnp.bfloat16) + _nbytes((GN, GN), jnp.bfloat16)
        + _nbytes((GE, EDGE_PAD), jnp.bfloat16)
        + _nbytes((NODE_PAD, HIDDEN), jnp.bfloat16)
        + _nbytes((NUM_LAYERS, HIDDEN, HIDDEN), jnp.bfloat16)
        + 2 * _nbytes((NUM_LAYERS, 1, HIDDEN), jnp.float32)
        + _nbytes((1, HIDDEN), jnp.float32) + _nbytes((EDGE_PAD, HIDDEN), jnp.bfloat16)
        + _nbytes((1, G, OUT_LANES), jnp.float32) + _nbytes((GE, HIDDEN), jnp.float32)
    )
    vmem_limit = min(max(2 * block_bytes + (2 << 20), 4 << 20), 128 << 20)

    cp = pltpu.CompilerParams(dimension_semantics=("parallel",),
                              vmem_limit_bytes=int(vmem_limit))

    out_raw, e_emb = pl.pallas_call(
        _make_gcn_kernel(G, N),
        out_shape=(jax.ShapeDtypeStruct((C, G, OUT_LANES), jnp.float32),
                   jax.ShapeDtypeStruct((B * E, HIDDEN), jnp.float32)),
        grid_spec=pltpu.PrefetchScalarGridSpec(
            num_scalar_prefetch=0,
            grid=(C,),
            in_specs=[
                pl.BlockSpec((GN, NODE_PAD), lambda c: (c, 0)),             # x slab
                pl.BlockSpec((GN, GN), lambda c: (c, 0)),                   # block-diag adj
                pl.BlockSpec((GE, EDGE_PAD), lambda c: (c, 0)),             # edge feats
                pl.BlockSpec((NODE_PAD, HIDDEN), lambda c: (0, 0)),         # w_node
                pl.BlockSpec((NUM_LAYERS, HIDDEN, HIDDEN), lambda c: (0, 0, 0)),  # w_layers
                pl.BlockSpec((NUM_LAYERS, 1, HIDDEN), lambda c: (0, 0, 0)),       # gammas
                pl.BlockSpec((NUM_LAYERS, 1, HIDDEN), lambda c: (0, 0, 0)),       # betas
                pl.BlockSpec((1, HIDDEN), lambda c: (0, 0)),                # w_out
                pl.BlockSpec((EDGE_PAD, HIDDEN), lambda c: (0, 0)),         # w_edge
            ],
            out_specs=[
                pl.BlockSpec((1, G, OUT_LANES), lambda c: (c, 0, 0)),       # logits
                pl.BlockSpec((GE, HIDDEN), lambda c: (c, 0)),               # edge embeddings
            ],
        ),
        compiler_params=cp,
    )(x_p, adj_bd, e_p, wn_p, wl_bf, gammas, betas, w_out, we_p)

    out = out_raw[:, :, 0].reshape(B, 1, 1)
    return out, e_emb.reshape(B, E, HIDDEN)


# --------------------------------------------------------------------------------------
# Pure-JAX reference (mirrors the wrapper's padding / bf16 operand casting exactly)
# --------------------------------------------------------------------------------------
def reference_forward(x, e_feat, adj, w_node, w_edge, w_layers, gammas, betas, w_out):
    x_p = jnp.pad(x, ((0, 0), (0, 0), (0, NODE_PAD - NODE_DIM))).astype(jnp.bfloat16)
    wn_p = jnp.pad(w_node, ((0, NODE_PAD - NODE_DIM), (0, 0))).astype(jnp.bfloat16)
    e_p = jnp.pad(e_feat, ((0, 0), (0, 0), (0, EDGE_PAD - EDGE_DIM))).astype(jnp.bfloat16)
    we_p = jnp.pad(w_edge, ((0, EDGE_PAD - EDGE_DIM), (0, 0))).astype(jnp.bfloat16)
    adj_bf = adj.astype(jnp.bfloat16)
    wl_bf = w_layers.astype(jnp.bfloat16)
    inv_h = 1.0 / HIDDEN

    def one_graph(xb, ab):
        h = jnp.dot(xb, wn_p, preferred_element_type=jnp.float32)
        h_bf = h.astype(jnp.bfloat16)
        for i in range(NUM_LAYERS):
            u_ = jnp.dot(ab, h_bf, preferred_element_type=jnp.float32)
            z = jnp.maximum(
                jnp.dot(u_.astype(jnp.bfloat16), wl_bf[i],
                        preferred_element_type=jnp.float32), 0.0) + h
            mu = jnp.sum(z, axis=-1, keepdims=True) * inv_h
            d = z - mu
            var = jnp.sum(d * d, axis=-1, keepdims=True) * inv_h
            h = d * jax.lax.rsqrt(var + LN_EPS) * gammas[i] + betas[i]
            h_bf = h.astype(jnp.bfloat16)
        pooled = jnp.sum(h, axis=0, keepdims=True)
        return jax.nn.sigmoid(jnp.sum(pooled * w_out, axis=-1, keepdims=True))

    out = jax.vmap(one_graph)(x_p, adj_bf)                                   # [B,1,1]
    e_emb = jax.vmap(
        lambda eb: jnp.dot(eb, we_p, preferred_element_type=jnp.float32))(e_p)
    return out, e_emb


# --------------------------------------------------------------------------------------
if __name__ == "__main__":
    key = jax.random.PRNGKey(0)
    ks = jax.random.split(key, 12)

    B, N, E = 4, 16, 32   # 4 graphs, 16 nodes / 32 edges each

    # graph data
    x = jax.random.normal(ks[0], (B, N, NODE_DIM), dtype=jnp.float32)
    e_feat = jax.random.normal(ks[1], (B, E, EDGE_DIM), dtype=jnp.float32)
    src = jax.random.randint(ks[2], (B, E), 0, N)
    dst = jax.random.randint(ks[3], (B, E), 0, N)
    adj = jnp.stack([
        jnp.zeros((N, N), jnp.float32).at[dst[b], src[b]].add(1.0)   # A[dst, src]
        for b in range(B)
    ])

    # parameters (Linear weights pre-transposed to [in, out]; w_out kept as [1, hidden])
    w_node = 0.1 * jax.random.normal(ks[4], (NODE_DIM, HIDDEN), dtype=jnp.float32)
    w_edge = 0.1 * jax.random.normal(ks[5], (EDGE_DIM, HIDDEN), dtype=jnp.float32)
    w_layers = 0.1 * jax.random.normal(ks[6], (NUM_LAYERS, HIDDEN, HIDDEN), dtype=jnp.float32)
    gammas = 1.0 + 0.1 * jax.random.normal(ks[7], (NUM_LAYERS, 1, HIDDEN), dtype=jnp.float32)
    betas = 0.1 * jax.random.normal(ks[8], (NUM_LAYERS, 1, HIDDEN), dtype=jnp.float32)
    w_out = 0.1 * jax.random.normal(ks[9], (1, HIDDEN), dtype=jnp.float32)

    out, e_emb = gcn_gat_model(x, e_feat, adj, w_node, w_edge,
                               w_layers, gammas, betas, w_out)
    jax.block_until_ready((out, e_emb))

    ref_out, ref_e = reference_forward(x, e_feat, adj, w_node, w_edge,
                                       w_layers, gammas, betas, w_out)

    assert out.shape == (B, 1, 1)
    assert e_emb.shape == (B, E, HIDDEN)
    assert jnp.allclose(out, ref_out, atol=1e-4, rtol=1e-4)
    assert jnp.allclose(e_emb, ref_e, atol=1e-4, rtol=1e-4)
    assert bool(jnp.all((out > 0.0) & (out < 1.0)))

    print("KERNEL_OK")
</pallas_src>

<mosaic_0001>
module attributes {stable_mosaic.version = 11 : i64} {
  func.func @kernel(%arg0: i32, %arg1: memref<32x64xbf16, #tpu.memory_space<vmem>>, %arg2: memref<32x32xbf16, #tpu.memory_space<vmem>>, %arg3: memref<64x8xbf16, #tpu.memory_space<vmem>>, %arg4: memref<64x64xbf16, #tpu.memory_space<vmem>>, %arg5: memref<4x64x64xbf16, #tpu.memory_space<vmem>>, %arg6: memref<4x1x64xf32, #tpu.memory_space<vmem>>, %arg7: memref<4x1x64xf32, #tpu.memory_space<vmem>>, %arg8: memref<1x64xf32, #tpu.memory_space<vmem>>, %arg9: memref<8x64xbf16, #tpu.memory_space<vmem>>, %arg10: memref<1x2x128xf32, #tpu.memory_space<vmem>>, %arg11: memref<64x64xf32, #tpu.memory_space<vmem>>) attributes {dimension_semantics = [#tpu.dimension_semantics<parallel>], iteration_bounds = array<i64: 2>, scalar_prefetch = 0 : i64, scratch_operands = 0 : i64, tpu.core_type = #tpu.core_type<tc>, window_params = [{transform_indices = @transform_0, window_bounds = array<i64: 32, 64>}, {transform_indices = @transform_1, window_bounds = array<i64: 32, 32>}, {transform_indices = @transform_2, window_bounds = array<i64: 64, 8>}, {pipeline_mode = #tpu.pipeline_mode<synchronous>, transform_indices = @transform_3, window_bounds = array<i64: 64, 64>}, {pipeline_mode = #tpu.pipeline_mode<synchronous>, transform_indices = @transform_4, window_bounds = array<i64: 4, 64, 64>}, {pipeline_mode = #tpu.pipeline_mode<synchronous>, transform_indices = @transform_5, window_bounds = array<i64: 4, 1, 64>}, {pipeline_mode = #tpu.pipeline_mode<synchronous>, transform_indices = @transform_6, window_bounds = array<i64: 4, 1, 64>}, {pipeline_mode = #tpu.pipeline_mode<synchronous>, transform_indices = @transform_7, window_bounds = array<i64: 1, 64>}, {pipeline_mode = #tpu.pipeline_mode<synchronous>, transform_indices = @transform_8, window_bounds = array<i64: 8, 64>}, {transform_indices = @transform_9, window_bounds = array<i64: 1, 2, 128>}, {transform_indices = @transform_10, window_bounds = array<i64: 64, 64>}]} {
    %c0 = arith.constant 0 : index
    %c0_0 = arith.constant 0 : index
    %0 = vector.load %arg3[%c0, %c0_0] : memref<64x8xbf16, #tpu.memory_space<vmem>>, vector<64x8xbf16>
    %c0_1 = arith.constant 0 : index
    %c0_2 = arith.constant 0 : index
    %1 = vector.load %arg9[%c0_1, %c0_2] : memref<8x64xbf16, #tpu.memory_space<vmem>>, vector<8x64xbf16>
    %cst = arith.constant dense<0.000000e+00> : vector<64x64xf32>
    %2 = tpu.matmul %0, %1, %cst {dimension_numbers = #tpu.dot_dimension_numbers<[1], [0], [0], [1], [0, 0, 1, 1], [], []>} : vector<64x8xbf16>, vector<8x64xbf16>, vector<64x64xf32> -> vector<64x64xf32>
    %c0_3 = arith.constant 0 : index
    %c0_4 = arith.constant 0 : index
    %3 = vector.load %arg11[%c0_3, %c0_4] : memref<64x64xf32, #tpu.memory_space<vmem>>, vector<64x64xf32>
    tpu.vector_store %arg11[%c0_3, %c0_4], %2 {strides = array<i32>} : memref<64x64xf32, #tpu.memory_space<vmem>>, vector<64x64xf32>,
    %c0_5 = arith.constant 0 : index
    %c0_6 = arith.constant 0 : index
    %4 = vector.load %arg2[%c0_5, %c0_6] : memref<32x32xbf16, #tpu.memory_space<vmem>>, vector<32x32xbf16>
    %c0_7 = arith.constant 0 : index
    %c0_8 = arith.constant 0 : index
    %5 = vector.load %arg1[%c0_7, %c0_8] : memref<32x64xbf16, #tpu.memory_space<vmem>>, vector<32x64xbf16>
    %c0_9 = arith.constant 0 : index
    %c0_10 = arith.constant 0 : index
    %6 = vector.load %arg4[%c0_9, %c0_10] : memref<64x64xbf16, #tpu.memory_space<vmem>>, vector<64x64xbf16>
    %cst_11 = arith.constant dense<0.000000e+00> : vector<32x64xf32>
    %7 = tpu.matmul %5, %6, %cst_11 {dimension_numbers = #tpu.dot_dimension_numbers<[1], [0], [0], [1], [0, 0, 1, 1], [], []>} : vector<32x64xbf16>, vector<64x64xbf16>, vector<32x64xf32> -> vector<32x64xf32>
    %8 = arith.truncf %7 : vector<32x64xf32> to vector<32x64xbf16>
    %cst_12 = arith.constant dense<0.000000e+00> : vector<32x64xf32>
    %9 = tpu.matmul %4, %8, %cst_12 {dimension_numbers = #tpu.dot_dimension_numbers<[1], [0], [0], [1], [0, 0, 1, 1], [], []>} : vector<32x32xbf16>, vector<32x64xbf16>, vector<32x64xf32> -> vector<32x64xf32>
    %10 = arith.truncf %9 : vector<32x64xf32> to vector<32x64xbf16>
    %c0_13 = arith.constant 0 : index
    %c0_14 = arith.constant 0 : index
    %c0_15 = arith.constant 0 : index
    %11 = vector.load %arg5[%c0_13, %c0_14, %c0_15] : memref<4x64x64xbf16, #tpu.memory_space<vmem>>, vector<1x64x64xbf16>
    %12 = vector.shape_cast %11 : vector<1x64x64xbf16> to vector<64x64xbf16>
    %cst_16 = arith.constant dense<0.000000e+00> : vector<32x64xf32>
    %13 = tpu.matmul %10, %12, %cst_16 {dimension_numbers = #tpu.dot_dimension_numbers<[1], [0], [0], [1], [0, 0, 1, 1], [], []>} : vector<32x64xbf16>, vector<64x64xbf16>, vector<32x64xf32> -> vector<32x64xf32>
    %cst_17 = arith.constant 0.000000e+00 : f32
    %14 = vector.broadcast %cst_17 : f32 to vector<32x64xf32>
    %15 = arith.maximumf %13, %14 : vector<32x64xf32>
    %16 = arith.addf %15, %7 : vector<32x64xf32>
    %cst_18 = arith.constant dense<0.000000e+00> : vector<32xf32>
    %17 = vector.multi_reduction <add>, %16, %cst_18 [1] : vector<32x64xf32> to vector<32xf32>
    %18 = vector.shape_cast %17 : vector<32xf32> to vector<32x1xf32>
    %cst_19 = arith.constant 1.562500e-02 : f32
    %19 = vector.broadcast %cst_19 : f32 to vector<32x1xf32>
    %20 = arith.mulf %18, %19 : vector<32x1xf32>
    %21 = vector.broadcast %20 : vector<32x1xf32> to vector<32x64xf32>
    %22 = arith.subf %16, %21 : vector<32x64xf32>
    %23 = arith.mulf %22, %22 : vector<32x64xf32>
    %cst_20 = arith.constant dense<0.000000e+00> : vector<32xf32>
    %24 = vector.multi_reduction <add>, %23, %cst_20 [1] : vector<32x64xf32> to vector<32xf32>
    %25 = vector.shape_cast %24 : vector<32xf32> to vector<32x1xf32>
    %cst_21 = arith.constant 1.562500e-02 : f32
    %26 = vector.broadcast %cst_21 : f32 to vector<32x1xf32>
    %27 = arith.mulf %25, %26 : vector<32x1xf32>
    %cst_22 = arith.constant 9.99999974E-6 : f32
    %28 = vector.broadcast %cst_22 : f32 to vector<32x1xf32>
    %29 = arith.addf %27, %28 : vector<32x1xf32>
    %30 = math.rsqrt %29 : vector<32x1xf32>
    %31 = vector.broadcast %30 : vector<32x1xf32> to vector<32x64xf32>
    %32 = arith.mulf %22, %31 : vector<32x64xf32>
    %c0_23 = arith.constant 0 : index
    %c0_24 = arith.constant 0 : index
    %c0_25 = arith.constant 0 : index
    %33 = vector.load %arg6[%c0_23, %c0_24, %c0_25] : memref<4x1x64xf32, #tpu.memory_space<vmem>>, vector<1x1x64xf32>
    %34 = vector.shape_cast %33 : vector<1x1x64xf32> to vector<1x64xf32>
    %35 = vector.broadcast %34 : vector<1x64xf32> to vector<32x64xf32>
    %36 = arith.mulf %32, %35 : vector<32x64xf32>
    %c0_26 = arith.constant 0 : index
    %c0_27 = arith.constant 0 : index
    %c0_28 = arith.constant 0 : index
    %37 = vector.load %arg7[%c0_26, %c0_27, %c0_28] : memref<4x1x64xf32, #tpu.memory_space<vmem>>, vector<1x1x64xf32>
    %38 = vector.shape_cast %37 : vector<1x1x64xf32> to vector<1x64xf32>
    %39 = vector.broadcast %38 : vector<1x64xf32> to vector<32x64xf32>
    %40 = arith.addf %36, %39 : vector<32x64xf32>
    %41 = arith.truncf %40 : vector<32x64xf32> to vector<32x64xbf16>
    %cst_29 = arith.constant dense<0.000000e+00> : vector<32x64xf32>
    %42 = tpu.matmul %4, %41, %cst_29 {dimension_numbers = #tpu.dot_dimension_numbers<[1], [0], [0], [1], [0, 0, 1, 1], [], []>} : vector<32x32xbf16>, vector<32x64xbf16>, vector<32x64xf32> -> vector<32x64xf32>
    %43 = arith.truncf %42 : vector<32x64xf32> to vector<32x64xbf16>
    %c1 = arith.constant 1 : index
    %c0_30 = arith.constant 0 : index
    %c0_31 = arith.constant 0 : index
    %44 = vector.load %arg5[%c1, %c0_30, %c0_31] : memref<4x64x64xbf16, #tpu.memory_space<vmem>>, vector<1x64x64xbf16>
    %45 = vector.shape_cast %44 : vector<1x64x64xbf16> to vector<64x64xbf16>
    %cst_32 = arith.constant dense<0.000000e+00> : vector<32x64xf32>
    %46 = tpu.matmul %43, %45, %cst_32 {dimension_numbers = #tpu.dot_dimension_numbers<[1], [0], [0], [1], [0, 0, 1, 1], [], []>} : vector<32x64xbf16>, vector<64x64xbf16>, vector<32x64xf32> -> vector<32x64xf32>
    %cst_33 = arith.constant 0.000000e+00 : f32
    %47 = vector.broadcast %cst_33 : f32 to vector<32x64xf32>
    %48 = arith.maximumf %46, %47 : vector<32x64xf32>
    %49 = arith.addf %48, %40 : vector<32x64xf32>
    %cst_34 = arith.constant dense<0.000000e+00> : vector<32xf32>
    %50 = vector.multi_reduction <add>, %49, %cst_34 [1] : vector<32x64xf32> to vector<32xf32>
    %51 = vector.shape_cast %50 : vector<32xf32> to vector<32x1xf32>
    %cst_35 = arith.constant 1.562500e-02 : f32
    %52 = vector.broadcast %cst_35 : f32 to vector<32x1xf32>
    %53 = arith.mulf %51, %52 : vector<32x1xf32>
    %54 = vector.broadcast %53 : vector<32x1xf32> to vector<32x64xf32>
    %55 = arith.subf %49, %54 : vector<32x64xf32>
    %56 = arith.mulf %55, %55 : vector<32x64xf32>
    %cst_36 = arith.constant dense<0.000000e+00> : vector<32xf32>
    %57 = vector.multi_reduction <add>, %56, %cst_36 [1] : vector<32x64xf32> to vector<32xf32>
    %58 = vector.shape_cast %57 : vector<32xf32> to vector<32x1xf32>
    %cst_37 = arith.constant 1.562500e-02 : f32
    %59 = vector.broadcast %cst_37 : f32 to vector<32x1xf32>
    %60 = arith.mulf %58, %59 : vector<32x1xf32>
    %cst_38 = arith.constant 9.99999974E-6 : f32
    %61 = vector.broadcast %cst_38 : f32 to vector<32x1xf32>
    %62 = arith.addf %60, %61 : vector<32x1xf32>
    %63 = math.rsqrt %62 : vector<32x1xf32>
    %64 = vector.broadcast %63 : vector<32x1xf32> to vector<32x64xf32>
    %65 = arith.mulf %55, %64 : vector<32x64xf32>
    %c1_39 = arith.constant 1 : index
    %c0_40 = arith.constant 0 : index
    %c0_41 = arith.constant 0 : index
    %66 = vector.load %arg6[%c1_39, %c0_40, %c0_41] : memref<4x1x64xf32, #tpu.memory_space<vmem>>, vector<1x1x64xf32>
    %67 = vector.shape_cast %66 : vector<1x1x64xf32> to vector<1x64xf32>
    %68 = vector.broadcast %67 : vector<1x64xf32> to vector<32x64xf32>
    %69 = arith.mulf %65, %68 : vector<32x64xf32>
    %c1_42 = arith.constant 1 : index
    %c0_43 = arith.constant 0 : index
    %c0_44 = arith.constant 0 : index
    %70 = vector.load %arg7[%c1_42, %c0_43, %c0_44] : memref<4x1x64xf32, #tpu.memory_space<vmem>>, vector<1x1x64xf32>
    %71 = vector.shape_cast %70 : vector<1x1x64xf32> to vector<1x64xf32>
    %72 = vector.broadcast %71 : vector<1x64xf32> to vector<32x64xf32>
    %73 = arith.addf %69, %72 : vector<32x64xf32>
    %74 = arith.truncf %73 : vector<32x64xf32> to vector<32x64xbf16>
    %cst_45 = arith.constant dense<0.000000e+00> : vector<32x64xf32>
    %75 = tpu.matmul %4, %74, %cst_45 {dimension_numbers = #tpu.dot_dimension_numbers<[1], [0], [0], [1], [0, 0, 1, 1], [], []>} : vector<32x32xbf16>, vector<32x64xbf16>, vector<32x64xf32> -> vector<32x64xf32>
    %76 = arith.truncf %75 : vector<32x64xf32> to vector<32x64xbf16>
    %c2 = arith.constant 2 : index
    %c0_46 = arith.constant 0 : index
    %c0_47 = arith.constant 0 : index
    %77 = vector.load %arg5[%c2, %c0_46, %c0_47] : memref<4x64x64xbf16, #tpu.memory_space<vmem>>, vector<1x64x64xbf16>
    %78 = vector.shape_cast %77 : vector<1x64x64xbf16> to vector<64x64xbf16>
    %cst_48 = arith.constant dense<0.000000e+00> : vector<32x64xf32>
    %79 = tpu.matmul %76, %78, %cst_48 {dimension_numbers = #tpu.dot_dimension_numbers<[1], [0], [0], [1], [0, 0, 1, 1], [], []>} : vector<32x64xbf16>, vector<64x64xbf16>, vector<32x64xf32> -> vector<32x64xf32>
    %cst_49 = arith.constant 0.000000e+00 : f32
    %80 = vector.broadcast %cst_49 : f32 to vector<32x64xf32>
    %81 = arith.maximumf %79, %80 : vector<32x64xf32>
    %82 = arith.addf %81, %73 : vector<32x64xf32>
    %cst_50 = arith.constant dense<0.000000e+00> : vector<32xf32>
    %83 = vector.multi_reduction <add>, %82, %cst_50 [1] : vector<32x64xf32> to vector<32xf32>
    %84 = vector.shape_cast %83 : vector<32xf32> to vector<32x1xf32>
    %cst_51 = arith.constant 1.562500e-02 : f32
    %85 = vector.broadcast %cst_51 : f32 to vector<32x1xf32>
    %86 = arith.mulf %84, %85 : vector<32x1xf32>
    %87 = vector.broadcast %86 : vector<32x1xf32> to vector<32x64xf32>
    %88 = arith.subf %82, %87 : vector<32x64xf32>
    %89 = arith.mulf %88, %88 : vector<32x64xf32>
    %cst_52 = arith.constant dense<0.000000e+00> : vector<32xf32>
    %90 = vector.multi_reduction <add>, %89, %cst_52 [1] : vector<32x64xf32> to vector<32xf32>
    %91 = vector.shape_cast %90 : vector<32xf32> to vector<32x1xf32>
    %cst_53 = arith.constant 1.562500e-02 : f32
    %92 = vector.broadcast %cst_53 : f32 to vector<32x1xf32>
    %93 = arith.mulf %91, %92 : vector<32x1xf32>
    %cst_54 = arith.constant 9.99999974E-6 : f32
    %94 = vector.broadcast %cst_54 : f32 to vector<32x1xf32>
    %95 = arith.addf %93, %94 : vector<32x1xf32>
    %96 = math.rsqrt %95 : vector<32x1xf32>
    %97 = vector.broadcast %96 : vector<32x1xf32> to vector<32x64xf32>
    %98 = arith.mulf %88, %97 : vector<32x64xf32>
    %c2_55 = arith.constant 2 : index
    %c0_56 = arith.constant 0 : index
    %c0_57 = arith.constant 0 : index
    %99 = vector.load %arg6[%c2_55, %c0_56, %c0_57] : memref<4x1x64xf32, #tpu.memory_space<vmem>>, vector<1x1x64xf32>
    %100 = vector.shape_cast %99 : vector<1x1x64xf32> to vector<1x64xf32>
    %101 = vector.broadcast %100 : vector<1x64xf32> to vector<32x64xf32>
    %102 = arith.mulf %98, %101 : vector<32x64xf32>
    %c2_58 = arith.constant 2 : index
    %c0_59 = arith.constant 0 : index
    %c0_60 = arith.constant 0 : index
    %103 = vector.load %arg7[%c2_58, %c0_59, %c0_60] : memref<4x1x64xf32, #tpu.memory_space<vmem>>, vector<1x1x64xf32>
    %104 = vector.shape_cast %103 : vector<1x1x64xf32> to vector<1x64xf32>
    %105 = vector.broadcast %104 : vector<1x64xf32> to vector<32x64xf32>
    %106 = arith.addf %102, %105 : vector<32x64xf32>
    %107 = arith.truncf %106 : vector<32x64xf32> to vector<32x64xbf16>
    %cst_61 = arith.constant dense<0.000000e+00> : vector<32x64xf32>
    %108 = tpu.matmul %4, %107, %cst_61 {dimension_numbers = #tpu.dot_dimension_numbers<[1], [0], [0], [1], [0, 0, 1, 1], [], []>} : vector<32x32xbf16>, vector<32x64xbf16>, vector<32x64xf32> -> vector<32x64xf32>
    %109 = arith.truncf %108 : vector<32x64xf32> to vector<32x64xbf16>
    %c3 = arith.constant 3 : index
    %c0_62 = arith.constant 0 : index
    %c0_63 = arith.constant 0 : index
    %110 = vector.load %arg5[%c3, %c0_62, %c0_63] : memref<4x64x64xbf16, #tpu.memory_space<vmem>>, vector<1x64x64xbf16>
    %111 = vector.shape_cast %110 : vector<1x64x64xbf16> to vector<64x64xbf16>
    %cst_64 = arith.constant dense<0.000000e+00> : vector<32x64xf32>
    %112 = tpu.matmul %109, %111, %cst_64 {dimension_numbers = #tpu.dot_dimension_numbers<[1], [0], [0], [1], [0, 0, 1, 1], [], []>} : vector<32x64xbf16>, vector<64x64xbf16>, vector<32x64xf32> -> vector<32x64xf32>
    %cst_65 = arith.constant 0.000000e+00 : f32
    %113 = vector.broadcast %cst_65 : f32 to vector<32x64xf32>
    %114 = arith.maximumf %112, %113 : vector<32x64xf32>
    %115 = arith.addf %114, %106 : vector<32x64xf32>
    %cst_66 = arith.constant dense<0.000000e+00> : vector<32xf32>
    %116 = vector.multi_reduction <add>, %115, %cst_66 [1] : vector<32x64xf32> to vector<32xf32>
    %117 = vector.shape_cast %116 : vector<32xf32> to vector<32x1xf32>
    %cst_67 = arith.constant 1.562500e-02 : f32
    %118 = vector.broadcast %cst_67 : f32 to vector<32x1xf32>
    %119 = arith.mulf %117, %118 : vector<32x1xf32>
    %120 = vector.broadcast %119 : vector<32x1xf32> to vector<32x64xf32>
    %121 = arith.subf %115, %120 : vector<32x64xf32>
    %122 = arith.mulf %121, %121 : vector<32x64xf32>
    %cst_68 = arith.constant dense<0.000000e+00> : vector<32xf32>
    %123 = vector.multi_reduction <add>, %122, %cst_68 [1] : vector<32x64xf32> to vector<32xf32>
    %124 = vector.shape_cast %123 : vector<32xf32> to vector<32x1xf32>
    %cst_69 = arith.constant 1.562500e-02 : f32
    %125 = vector.broadcast %cst_69 : f32 to vector<32x1xf32>
    %126 = arith.mulf %124, %125 : vector<32x1xf32>
    %cst_70 = arith.constant 9.99999974E-6 : f32
    %127 = vector.broadcast %cst_70 : f32 to vector<32x1xf32>
    %128 = arith.addf %126, %127 : vector<32x1xf32>
    %129 = math.rsqrt %128 : vector<32x1xf32>
    %130 = vector.broadcast %129 : vector<32x1xf32> to vector<32x64xf32>
    %131 = arith.mulf %121, %130 : vector<32x64xf32>
    %c3_71 = arith.constant 3 : index
    %c0_72 = arith.constant 0 : index
    %c0_73 = arith.constant 0 : index
    %132 = vector.load %arg6[%c3_71, %c0_72, %c0_73] : memref<4x1x64xf32, #tpu.memory_space<vmem>>, vector<1x1x64xf32>
    %133 = vector.shape_cast %132 : vector<1x1x64xf32> to vector<1x64xf32>
    %134 = vector.broadcast %133 : vector<1x64xf32> to vector<32x64xf32>
    %135 = arith.mulf %131, %134 : vector<32x64xf32>
    %c3_74 = arith.constant 3 : index
    %c0_75 = arith.constant 0 : index
    %c0_76 = arith.constant 0 : index
    %136 = vector.load %arg7[%c3_74, %c0_75, %c0_76] : memref<4x1x64xf32, #tpu.memory_space<vmem>>, vector<1x1x64xf32>
    %137 = vector.shape_cast %136 : vector<1x1x64xf32> to vector<1x64xf32>
    %138 = vector.broadcast %137 : vector<1x64xf32> to vector<32x64xf32>
    %139 = arith.addf %135, %138 : vector<32x64xf32>
    %140 = vector.extract_strided_slice %139 {offsets = [0, 0], sizes = [16, 64], strides = [1, 1]} : vector<32x64xf32> to vector<16x64xf32>
    %cst_77 = arith.constant dense<0.000000e+00> : vector<64xf32>
    %141 = vector.multi_reduction <add>, %140, %cst_77 [0] : vector<16x64xf32> to vector<64xf32>
    %142 = vector.shape_cast %141 : vector<64xf32> to vector<1x64xf32>
    %143 = vector.extract_strided_slice %139 {offsets = [16, 0], sizes = [16, 64], strides = [1, 1]} : vector<32x64xf32> to vector<16x64xf32>
    %cst_78 = arith.constant dense<0.000000e+00> : vector<64xf32>
    %144 = vector.multi_reduction <add>, %143, %cst_78 [0] : vector<16x64xf32> to vector<64xf32>
    %145 = vector.shape_cast %144 : vector<64xf32> to vector<1x64xf32>
    %146 = tpu.concatenate %142, %145 in 0 : vector<1x64xf32>, vector<1x64xf32> -> vector<2x64xf32>
    %c0_79 = arith.constant 0 : index
    %c0_80 = arith.constant 0 : index
    %147 = vector.load %arg8[%c0_79, %c0_80] : memref<1x64xf32, #tpu.memory_space<vmem>>, vector<1x64xf32>
    %148 = vector.broadcast %147 : vector<1x64xf32> to vector<2x64xf32>
    %149 = arith.mulf %146, %148 : vector<2x64xf32>
    %cst_81 = arith.constant dense<0.000000e+00> : vector<2xf32>
    %150 = vector.multi_reduction <add>, %149, %cst_81 [1] : vector<2x64xf32> to vector<2xf32>
    %151 = vector.shape_cast %150 : vector<2xf32> to vector<2x1xf32>
    %152 = arith.negf %151 : vector<2x1xf32>
    %153 = math.exp %152 : vector<2x1xf32>
    %cst_82 = arith.constant 1.000000e+00 : f32
    %154 = vector.broadcast %cst_82 : f32 to vector<2x1xf32>
    %155 = arith.addf %154, %153 : vector<2x1xf32>
    %156 = arith.divf %154, %155 : vector<2x1xf32>
    %157 = vector.shape_cast %156 : vector<2x1xf32> to vector<2x1xf32>
    %158 = vector.broadcast %157 : vector<2x1xf32> to vector<2x128xf32>
    %c0_83 = arith.constant 0 : index
    %c0_84 = arith.constant 0 : index
    %c0_85 = arith.constant 0 : index
    %159 = vector.load %arg10[%c0_83, %c0_84, %c0_85] : memref<1x2x128xf32, #tpu.memory_space<vmem>>, vector<1x2x128xf32>
    %160 = vector.shape_cast %159 : vector<1x2x128xf32> to vector<2x128xf32>
    %161 = vector.shape_cast %158 : vector<2x128xf32> to vector<1x2x128xf32>
    tpu.vector_store %arg10[%c0_83, %c0_84, %c0_85], %161 {strides = array<i32>} : memref<1x2x128xf32, #tpu.memory_space<vmem>>, vector<1x2x128xf32>,
    return
  }
  func.func @transform_0(%arg0: i32) -> (i32, i32) {
    %c0_i32 = arith.constant 0 : i32
    %c0_i32_0 = arith.constant 0 : i32
    return %arg0, %c0_i32 : i32, i32
  }
  func.func @transform_1(%arg0: i32) -> (i32, i32) {
    %c0_i32 = arith.constant 0 : i32
    %c0_i32_0 = arith.constant 0 : i32
    return %arg0, %c0_i32 : i32, i32
  }
  func.func @transform_2(%arg0: i32) -> (i32, i32) {
    %c0_i32 = arith.constant 0 : i32
    %c0_i32_0 = arith.constant 0 : i32
    return %arg0, %c0_i32 : i32, i32
  }
  func.func @transform_3(%arg0: i32) -> (i32, i32) {
    %c0_i32 = arith.constant 0 : i32
    %c0_i32_0 = arith.constant 0 : i32
    %c0_i32_1 = arith.constant 0 : i32
    return %c0_i32, %c0_i32_0 : i32, i32
  }
  func.func @transform_4(%arg0: i32) -> (i32, i32, i32) {
    %c0_i32 = arith.constant 0 : i32
    %c0_i32_0 = arith.constant 0 : i32
    %c0_i32_1 = arith.constant 0 : i32
    %c0_i32_2 = arith.constant 0 : i32
    return %c0_i32, %c0_i32_0, %c0_i32_1 : i32, i32, i32
  }
  func.func @transform_5(%arg0: i32) -> (i32, i32, i32) {
    %c0_i32 = arith.constant 0 : i32
    %c0_i32_0 = arith.constant 0 : i32
    %c0_i32_1 = arith.constant 0 : i32
    %c0_i32_2 = arith.constant 0 : i32
    return %c0_i32, %c0_i32_0, %c0_i32_1 : i32, i32, i32
  }
  func.func @transform_6(%arg0: i32) -> (i32, i32, i32) {
    %c0_i32 = arith.constant 0 : i32
    %c0_i32_0 = arith.constant 0 : i32
    %c0_i32_1 = arith.constant 0 : i32
    %c0_i32_2 = arith.constant 0 : i32
    return %c0_i32, %c0_i32_0, %c0_i32_1 : i32, i32, i32
  }
  func.func @transform_7(%arg0: i32) -> (i32, i32) {
    %c0_i32 = arith.constant 0 : i32
    %c0_i32_0 = arith.constant 0 : i32
    %c0_i32_1 = arith.constant 0 : i32
    return %c0_i32, %c0_i32_0 : i32, i32
  }
  func.func @transform_8(%arg0: i32) -> (i32, i32) {
    %c0_i32 = arith.constant 0 : i32
    %c0_i32_0 = arith.constant 0 : i32
    %c0_i32_1 = arith.constant 0 : i32
    return %c0_i32, %c0_i32_0 : i32, i32
  }
  func.func @transform_9(%arg0: i32) -> (i32, i32, i32) {
    %c0_i32 = arith.constant 0 : i32
    %c0_i32_0 = arith.constant 0 : i32
    %c0_i32_1 = arith.constant 0 : i32
    return %arg0, %c0_i32, %c0_i32_0 : i32, i32, i32
  }
  func.func @transform_10(%arg0: i32) -> (i32, i32) {
    %c0_i32 = arith.constant 0 : i32
    %c0_i32_0 = arith.constant 0 : i32
    return %arg0, %c0_i32 : i32, i32
  }
}

</mosaic_0001>

<llo_original>
// kernel: tpu_custom_call.1
$region0: #{tpu_custom_call.1}
  #allocation0 [shape = 'u32[]', space=smem, size = 0x4, offset = 0x4, fixed_abs, tag = 'smem constant byte address 0x4 - core index']
  #allocation1 [shape = 'u32[72,128]{1,0:T(1,128)}', space=vmem, size = 0x9000, scoped, tag = 'internal scratch']
  %s0 = inlined_call_operand.vmem [shape: bf16[64,64], index: 0, kind: input, shape index: {}]
  %s1 = inlined_call_operand.vmem [shape: bf16[64,32], index: 1, kind: input, shape index: {}]
  %s2 = inlined_call_operand.vmem [shape: bf16[128,8], index: 2, kind: input, shape index: {}]
  %s3 = inlined_call_operand.vmem [shape: bf16[64,64], index: 3, kind: input, shape index: {}]
  %s4 = inlined_call_operand.hbm [shape: bf16[4,64,64], index: 4, kind: input, shape index: {}]
  %s5 = inlined_call_operand.vmem [shape: f32[4,1,64], index: 5, kind: input, shape index: {}]
  %s6 = inlined_call_operand.vmem [shape: f32[4,1,64], index: 6, kind: input, shape index: {}]
  %s7 = inlined_call_operand.vmem [shape: f32[1,64], index: 7, kind: input, shape index: {}]
  %s8 = inlined_call_operand.vmem [shape: bf16[8,64], index: 8, kind: input, shape index: {}]
  %s9 = inlined_call_operand.hbm [shape: f32[2,2,128], index: 9, kind: output, shape index: {0}]
  %s10 = inlined_call_operand.vmem [shape: f32[128,64], index: 10, kind: output, shape index: {1}]
  %11 = xla_tuple %s9, %s10
  %s12 = sld [smem:[#allocation0]]
  $region81: #{tpu_custom_call.1} parent=0
    _
  %s14 = ssub.s32 1, %s12
  %s15 = scalar_select 0, %s14, %s12
  $region1: #{tpu_custom_call.1} parent=0
    #allocation2 [shape = 'u8[65536]{0}', space=vmem, size = 0x10000, scoped, tag = 'input window, operand 4, single buffered']
    #allocation3 [shape = 's32[2]{0}', space=sflag, size = 0x8, scoped, tag = 'scoped memory for tpu_custom_call.1']
    #allocation4 [shape = 's32[2]{0}', space=sflag, size = 0x8, scoped, tag = 'scoped memory for tpu_custom_call.1']
    #allocation5 [shape = 'u8[2048]{0}', space=vmem, size = 0x800, scoped, tag = 'output window, operand 0']
    %16 = vsyncpa [#allocation3], 0
    %17 = vsyncpa [#allocation4], 0
    %s18 = scalar_lea.sflag [#allocation4], 1
    %19 = vsyncpa %s18, 0
    loop: start=0, step=1, limit=4
    $region2: #{tpu_custom_call.1} parent=1 // loop_pre_header
      _
    $region3: #{tpu_custom_call.1} parent=1 // loop_header
      %s21 = sphi 0, %s25
      %p22 = scmp.ge.s32.totalorder %s21, 4
      %s31 = sphi 0, %s33
      %s34 = sphi 0, %s31
      %s35 = sphi 0, %s34
      %s51 = sphi 0, %s35
      %s57 = sphi 0, %s59
      %s60 = sphi 0, %s57
      %s61 = sphi 0, %s60
      %s77 = sphi 0, %s61
      %s83 = sphi 0, %s85
      %s86 = sphi 0, %s83
      %s87 = sphi 0, %s86
      %s103 = sphi 0, %s87
      %s107 = sphi 0, %s107
      %s109 = sphi 0, %s107
      %s110 = sphi 0, %s109
      %s124 = sphi 0, %s110
      %s128 = sphi 0, %s128
      %s130 = sphi 0, %s128
      %s131 = sphi 0, %s130
      %s145 = sphi 0, %s131
      %s149 = sphi 0, %s149
      %s151 = sphi 0, %s149
      %s152 = sphi 0, %s151
      %s166 = sphi 0, %s152
      %s170 = sphi 0, %s170
      %s172 = sphi 0, %s170
      %s173 = sphi 0, %s172
      %s187 = sphi 0, %s173
      %s191 = sphi 0, %s191
      %s193 = sphi 0, %s191
      %s194 = sphi 0, %s193
      %s208 = sphi 0, %s194
      %s212 = sphi 0, %s212
      %s214 = sphi 0, %s212
      %s215 = sphi 0, %s214
      %s229 = sphi 0, %s215
      %s235 = sphi 0, %s237
      %s238 = sphi 0, %s235
      %s239 = sphi 0, %s238
      %s255 = sphi 0, %s239
      %s261 = sphi 0, %s263
      %s264 = sphi 0, %s261
      %s265 = sphi 0, %s264
      %s281 = sphi 0, %s265
    $region4: #{tpu_custom_call.1} parent=1 // loop_header_branch
      %24 = sbr.rel (%p22) target = $region8
    $region5: #{tpu_custom_call.1} parent=1 // loop_body
      %s26 = ssub.s32 %s21, 1
      %s27 = ssub.s32 %s21, 2
      %s28 = sadd.s32 %s21, 1
      %s29 = ssub.s32 %s21, %s28
      %p30 = scmp.eq.s32.totalorder %s29, 0
      %s32 = sadd.s32 %s31, 1
      %s33 = scalar_select %p30, %s31, %s32
      %p36 = pneg %p30
      %p37 = scmp.eq.s32.totalorder %s21, 1
      %p38 = por %p36, %p37
      %p39 = scmp.ne.s32.totalorder %s31, %s34
      %p40 = scmp.eq.s32.totalorder %s21, 0
      %p41 = por %p39, %p40
      %p42 = scmp.ne.s32.totalorder %s31, %s34
      %p43 = scmp.eq.s32.totalorder %s26, 1
      %p44 = por %p42, %p43
      %p45 = scmp.ne.s32.totalorder %s34, %s35
      %p46 = scmp.eq.s32.totalorder %s26, 0
      %p47 = por %p45, %p46
      %p48 = scmp.ne.s32.totalorder %s34, %s35
      %p49 = scmp.eq.s32.totalorder %s27, 1
      %p50 = por %p48, %p49
      %p52 = scmp.ne.s32.totalorder %s35, %s51
      %p53 = scmp.eq.s32.totalorder %s27, 0
      %p54 = por %p52, %p53
      %s55 = ssub.s32 %s21, %s28
      %p56 = scmp.eq.s32.totalorder %s55, 0
      %s58 = sadd.s32 %s57, 1
      %s59 = scalar_select %p56, %s57, %s58
      %p62 = pneg %p56
      %p63 = scmp.eq.s32.totalorder %s21, 1
      %p64 = por %p62, %p63
      %p65 = scmp.ne.s32.totalorder %s57, %s60
      %p66 = scmp.eq.s32.totalorder %s21, 0
      %p67 = por %p65, %p66
      %p68 = scmp.ne.s32.totalorder %s57, %s60
      %p69 = scmp.eq.s32.totalorder %s26, 1
      %p70 = por %p68, %p69
      %p71 = scmp.ne.s32.totalorder %s60, %s61
      %p72 = scmp.eq.s32.totalorder %s26, 0
      %p73 = por %p71, %p72
      %p74 = scmp.ne.s32.totalorder %s60, %s61
      %p75 = scmp.eq.s32.totalorder %s27, 1
      %p76 = por %p74, %p75
      %p78 = scmp.ne.s32.totalorder %s61, %s77
      %p79 = scmp.eq.s32.totalorder %s27, 0
      %p80 = por %p78, %p79
      %s81 = ssub.s32 %s21, %s28
      %p82 = scmp.eq.s32.totalorder %s81, 0
      %s84 = sadd.s32 %s83, 1
      %s85 = scalar_select %p82, %s83, %s84
      %p88 = pneg %p82
      %p89 = scmp.eq.s32.totalorder %s21, 1
      %p90 = por %p88, %p89
      %p91 = scmp.ne.s32.totalorder %s83, %s86
      %p92 = scmp.eq.s32.totalorder %s21, 0
      %p93 = por %p91, %p92
      %p94 = scmp.ne.s32.totalorder %s83, %s86
      %p95 = scmp.eq.s32.totalorder %s26, 1
      %p96 = por %p94, %p95
      %p97 = scmp.ne.s32.totalorder %s86, %s87
      %p98 = scmp.eq.s32.totalorder %s26, 0
      %p99 = por %p97, %p98
      %p100 = scmp.ne.s32.totalorder %s86, %s87
      %p101 = scmp.eq.s32.totalorder %s27, 1
      %p102 = por %p100, %p101
      %p104 = scmp.ne.s32.totalorder %s87, %s103
      %p105 = scmp.eq.s32.totalorder %s27, 0
      %p106 = por %p104, %p105
      %s108 = sadd.s32 %s107, 1
      %p111 = scmp.eq.s32.totalorder %s21, 1
      %p112 = scmp.ne.s32.totalorder %s107, %s109
      %p113 = scmp.eq.s32.totalorder %s21, 0
      %p114 = por %p112, %p113
      %p115 = scmp.ne.s32.totalorder %s107, %s109
      %p116 = scmp.eq.s32.totalorder %s26, 1
      %p117 = por %p115, %p116
      %p118 = scmp.ne.s32.totalorder %s109, %s110
      %p119 = scmp.eq.s32.totalorder %s26, 0
      %p120 = por %p118, %p119
      %p121 = scmp.ne.s32.totalorder %s109, %s110
      %p122 = scmp.eq.s32.totalorder %s27, 1
      %p123 = por %p121, %p122
      %p125 = scmp.ne.s32.totalorder %s110, %s124
      %p126 = scmp.eq.s32.totalorder %s27, 0
      %p127 = por %p125, %p126
      %s129 = sadd.s32 %s128, 1
      %p132 = scmp.eq.s32.totalorder %s21, 1
      %p133 = scmp.ne.s32.totalorder %s128, %s130
      %p134 = scmp.eq.s32.totalorder %s21, 0
      %p135 = por %p133, %p134
      %p136 = scmp.ne.s32.totalorder %s128, %s130
      %p137 = scmp.eq.s32.totalorder %s26, 1
      %p138 = por %p136, %p137
      %p139 = scmp.ne.s32.totalorder %s130, %s131
      %p140 = scmp.eq.s32.totalorder %s26, 0
      %p141 = por %p139, %p140
      %p142 = scmp.ne.s32.totalorder %s130, %s131
      %p143 = scmp.eq.s32.totalorder %s27, 1
      %p144 = por %p142, %p143
      %p146 = scmp.ne.s32.totalorder %s131, %s145
      %p147 = scmp.eq.s32.totalorder %s27, 0
      %p148 = por %p146, %p147
      %s150 = sadd.s32 %s149, 1
      %p153 = scmp.eq.s32.totalorder %s21, 1
      %p154 = scmp.ne.s32.totalorder %s149, %s151
      %p155 = scmp.eq.s32.totalorder %s21, 0
      %p156 = por %p154, %p155
      %p157 = scmp.ne.s32.totalorder %s149, %s151
      %p158 = scmp.eq.s32.totalorder %s26, 1
      %p159 = por %p157, %p158
      %p160 = scmp.ne.s32.totalorder %s151, %s152
      %p161 = scmp.eq.s32.totalorder %s26, 0
      %p162 = por %p160, %p161
      %p163 = scmp.ne.s32.totalorder %s151, %s152
      %p164 = scmp.eq.s32.totalorder %s27, 1
      %p165 = por %p163, %p164
      %p167 = scmp.ne.s32.totalorder %s152, %s166
      %p168 = scmp.eq.s32.totalorder %s27, 0
      %p169 = por %p167, %p168
      %s171 = sadd.s32 %s170, 1
      %p174 = scmp.eq.s32.totalorder %s21, 1
      %p175 = scmp.ne.s32.totalorder %s170, %s172
      %p176 = scmp.eq.s32.totalorder %s21, 0
      %p177 = por %p175, %p176
      %p178 = scmp.ne.s32.totalorder %s170, %s172
      %p179 = scmp.eq.s32.totalorder %s26, 1
      %p180 = por %p178, %p179
      %p181 = scmp.ne.s32.totalorder %s172, %s173
      %p182 = scmp.eq.s32.totalorder %s26, 0
      %p183 = por %p181, %p182
      %p184 = scmp.ne.s32.totalorder %s172, %s173
      %p185 = scmp.eq.s32.totalorder %s27, 1
      %p186 = por %p184, %p185
      %p188 = scmp.ne.s32.totalorder %s173, %s187
      %p189 = scmp.eq.s32.totalorder %s27, 0
      %p190 = por %p188, %p189
      %s192 = sadd.s32 %s191, 1
      %p195 = scmp.eq.s32.totalorder %s21, 1
      %p196 = scmp.ne.s32.totalorder %s191, %s193
      %p197 = scmp.eq.s32.totalorder %s21, 0
      %p198 = por %p196, %p197
      %p199 = scmp.ne.s32.totalorder %s191, %s193
      %p200 = scmp.eq.s32.totalorder %s26, 1
      %p201 = por %p199, %p200
      %p202 = scmp.ne.s32.totalorder %s193, %s194
      %p203 = scmp.eq.s32.totalorder %s26, 0
      %p204 = por %p202, %p203
      %p205 = scmp.ne.s32.totalorder %s193, %s194
      %p206 = scmp.eq.s32.totalorder %s27, 1
      %p207 = por %p205, %p206
      %p209 = scmp.ne.s32.totalorder %s194, %s208
      %p210 = scmp.eq.s32.totalorder %s27, 0
      %p211 = por %p209, %p210
      %s213 = sadd.s32 %s212, 1
      %p216 = scmp.eq.s32.totalorder %s21, 1
      %p217 = scmp.ne.s32.totalorder %s212, %s214
      %p218 = scmp.eq.s32.totalorder %s21, 0
      %p219 = por %p217, %p218
      %p220 = scmp.ne.s32.totalorder %s212, %s214
      %p221 = scmp.eq.s32.totalorder %s26, 1
      %p222 = por %p220, %p221
      %p223 = scmp.ne.s32.totalorder %s214, %s215
      %p224 = scmp.eq.s32.totalorder %s26, 0
      %p225 = por %p223, %p224
      %p226 = scmp.ne.s32.totalorder %s214, %s215
      %p227 = scmp.eq.s32.totalorder %s27, 1
      %p228 = por %p226, %p227
      %p230 = scmp.ne.s32.totalorder %s215, %s229
      %p231 = scmp.eq.s32.totalorder %s27, 0
      %p232 = por %p230, %p231
      %s233 = ssub.s32 %s21, %s28
      %p234 = scmp.eq.s32.totalorder %s233, 0
      %s236 = sadd.s32 %s235, 1
      %s237 = scalar_select %p234, %s235, %s236
      %p240 = pneg %p234
      %p241 = scmp.eq.s32.totalorder %s21, 1
      %p242 = por %p240, %p241
      %p243 = scmp.ne.s32.totalorder %s235, %s238
      %p244 = scmp.eq.s32.totalorder %s21, 0
      %p245 = por %p243, %p244
      %p246 = scmp.ne.s32.totalorder %s235, %s238
      %p247 = scmp.eq.s32.totalorder %s26, 1
      %p248 = por %p246, %p247
      %p249 = scmp.ne.s32.totalorder %s238, %s239
      %p250 = scmp.eq.s32.totalorder %s26, 0
      %p251 = por %p249, %p250
      %p252 = scmp.ne.s32.totalorder %s238, %s239
      %p253 = scmp.eq.s32.totalorder %s27, 1
      %p254 = por %p252, %p253
      %p256 = scmp.ne.s32.totalorder %s239, %s255
      %p257 = scmp.eq.s32.totalorder %s27, 0
      %p258 = por %p256, %p257
      %s259 = ssub.s32 %s21, %s28
      %p260 = scmp.eq.s32.totalorder %s259, 0
      %s262 = sadd.s32 %s261, 1
      %s263 = scalar_select %p260, %s261, %s262
      %p266 = pneg %p260
      %p267 = scmp.eq.s32.totalorder %s21, 1
      %p268 = por %p266, %p267
      %p269 = scmp.ne.s32.totalorder %s261, %s264
      %p270 = scmp.eq.s32.totalorder %s21, 0
      %p271 = por %p269, %p270
      %p272 = scmp.ne.s32.totalorder %s261, %s264
      %p273 = scmp.eq.s32.totalorder %s26, 1
      %p274 = por %p272, %p273
      %p275 = scmp.ne.s32.totalorder %s264, %s265
      %p276 = scmp.eq.s32.totalorder %s26, 0
      %p277 = por %p275, %p276
      %p278 = scmp.ne.s32.totalorder %s264, %s265
      %p279 = scmp.eq.s32.totalorder %s27, 1
      %p280 = por %p278, %p279
      %p282 = scmp.ne.s32.totalorder %s265, %s281
      %p283 = scmp.eq.s32.totalorder %s27, 0
      %p284 = por %p282, %p283
      %p285 = scmp.le.s32.totalorder 1, %s21
      %p286 = scmp.lt.s32.totalorder %s21, 3
      %p287 = pnand %p285, %p286
      %p288 = pneg %p287
      // Predicated region
      $region9: #{tpu_custom_call.1} parent=5 // pred_check
        _
      $region10: #{tpu_custom_call.1} parent=5 // pred_check_branch
        %290 = sbr.rel (%p287) target = $region12
      $region11: #{tpu_custom_call.1} parent=5 // pred_region
        %s291 = ssub.s32 %s21, 1
        // Predicated region
        $region13: #{tpu_custom_call.1} parent=11 // pred_check
          %p292 = pneg %p120
        $region14: #{tpu_custom_call.1} parent=11 // pred_check_branch
          %294 = sbr.rel (%p292) target = $region16
        $region15: #{tpu_custom_call.1} parent=11 // pred_region
          _
        $region16: #{tpu_custom_call.1} parent=11 // pred_fallthru
          _
        // Predicated region
        $region17: #{tpu_custom_call.1} parent=11 // pred_check
          %p295 = pneg %p141
        $region18: #{tpu_custom_call.1} parent=11 // pred_check_branch
          %297 = sbr.rel (%p295) target = $region20
        $region19: #{tpu_custom_call.1} parent=11 // pred_region
          %299 = vsyncadd [#allocation3], 0
          %s300 = sshll.u32 %s4, 4
          %s301 = int_to_ptr.hbm [resolvable:$true] %s300
          %s302 = sshll.u32 [#allocation2], 4
          %s303 = int_to_ptr.vmem [resolvable:$true] %s302
          %308 = dma.hbm_to_vmem [thread:$0]  %s301, 2048, %s303, [#allocation3], 64, 64, 4
        $region20: #{tpu_custom_call.1} parent=11 // pred_fallthru
          _
        // Predicated region
        $region21: #{tpu_custom_call.1} parent=11 // pred_check
          %p309 = pneg %p162
        $region22: #{tpu_custom_call.1} parent=11 // pred_check_branch
          %311 = sbr.rel (%p309) target = $region24
        $region23: #{tpu_custom_call.1} parent=11 // pred_region
          _
        $region24: #{tpu_custom_call.1} parent=11 // pred_fallthru
          _
        // Predicated region
        $region25: #{tpu_custom_call.1} parent=11 // pred_check
          %p312 = pneg %p183
        $region26: #{tpu_custom_call.1} parent=11 // pred_check_branch
          %314 = sbr.rel (%p312) target = $region28
        $region27: #{tpu_custom_call.1} parent=11 // pred_region
          _
        $region28: #{tpu_custom_call.1} parent=11 // pred_fallthru
          _
        // Predicated region
        $region29: #{tpu_custom_call.1} parent=11 // pred_check
          %p315 = pneg %p204
        $region30: #{tpu_custom_call.1} parent=11 // pred_check_branch
          %317 = sbr.rel (%p315) target = $region32
        $region31: #{tpu_custom_call.1} parent=11 // pred_region
          _
        $region32: #{tpu_custom_call.1} parent=11 // pred_fallthru
          _
        // Predicated region
        $region33: #{tpu_custom_call.1} parent=11 // pred_check
          %p318 = pneg %p225
        $region34: #{tpu_custom_call.1} parent=11 // pred_check_branch
          %320 = sbr.rel (%p318) target = $region36
        $region35: #{tpu_custom_call.1} parent=11 // pred_region
          _
        $region36: #{tpu_custom_call.1} parent=11 // pred_fallthru
          _
      $region12: #{tpu_custom_call.1} parent=5 // pred_fallthru
        _
      %p321 = scmp.lt.s32.totalorder %s21, 2
      // Predicated region
      $region37: #{tpu_custom_call.1} parent=5 // pred_check
        %p322 = pneg %p321
      $region38: #{tpu_custom_call.1} parent=5 // pred_check_branch
        %324 = sbr.rel (%p322) target = $region40
      $region39: #{tpu_custom_call.1} parent=5 // pred_region
        // Predicated region
        $region41: #{tpu_custom_call.1} parent=39 // pred_check
          %p325 = pneg %p41
        $region42: #{tpu_custom_call.1} parent=39 // pred_check_branch
          %327 = sbr.rel (%p325) target = $region44
        $region43: #{tpu_custom_call.1} parent=39 // pred_region
          %s328 = smul.u32 4, %s21
          %p329 = scmp.lt.s32.totalorder %s328, 7
          %s330 = scalar_select %p329, %s328, 7
          %s331 = smul.addr %s330, 4
          %s332 = scalar_lea.vmem %s0, %s331
          %s333 = smul.u32 4, %s21
        $region44: #{tpu_custom_call.1} parent=39 // pred_fallthru
          _
        // Predicated region
        $region45: #{tpu_custom_call.1} parent=39 // pred_check
          %p334 = pneg %p67
        $region46: #{tpu_custom_call.1} parent=39 // pred_check_branch
          %336 = sbr.rel (%p334) target = $region48
        $region47: #{tpu_custom_call.1} parent=39 // pred_region
          %s337 = smul.u32 4, %s21
          %p338 = scmp.lt.s32.totalorder %s337, 7
          %s339 = scalar_select %p338, %s337, 7
          %s340 = smul.addr %s339, 4
          %s341 = scalar_lea.vmem %s1, %s340
          %s342 = smul.u32 4, %s21
        $region48: #{tpu_custom_call.1} parent=39 // pred_fallthru
          _
        // Predicated region
        $region49: #{tpu_custom_call.1} parent=39 // pred_check
          %p343 = pneg %p93
        $region50: #{tpu_custom_call.1} parent=39 // pred_check_branch
          %345 = sbr.rel (%p343) target = $region52
        $region51: #{tpu_custom_call.1} parent=39 // pred_region
          %s346 = smul.u32 8, %s21
          %p347 = scmp.lt.s32.totalorder %s346, 15
          %s348 = scalar_select %p347, %s346, 15
          %s349 = smul.addr %s348, 4
          %s350 = scalar_lea.vmem %s2, %s349
          %s351 = smul.u32 8, %s21
        $region52: #{tpu_custom_call.1} parent=39 // pred_fallthru
          _
      $region40: #{tpu_custom_call.1} parent=5 // pred_fallthru
        _
      %p352 = scmp.le.s32.totalorder 1, %s21
      %p353 = scmp.lt.s32.totalorder %s21, 3
      %p354 = pnand %p352, %p353
      %p355 = pneg %p354
      // Predicated region
      $region53: #{tpu_custom_call.1} parent=5 // pred_check
        _
      $region54: #{tpu_custom_call.1} parent=5 // pred_check_branch
        %357 = sbr.rel (%p354) target = $region56
      $region55: #{tpu_custom_call.1} parent=5 // pred_region
        %s358 = ssub.s32 %s21, 1
        // Predicated region
        $region57: #{tpu_custom_call.1} parent=55 // pred_check
          %p359 = pneg %p141
        $region58: #{tpu_custom_call.1} parent=55 // pred_check_branch
          %361 = sbr.rel (%p359) target = $region60
        $region59: #{tpu_custom_call.1} parent=55 // pred_region
          %363 = dma.done [#allocation3], 2048
        $region60: #{tpu_custom_call.1} parent=55 // pred_fallthru
          _
        %s364 = smul.u32 4, %s26
        %p365 = scmp.lt.s32.totalorder %s364, 7
        %s366 = scalar_select %p365, %s364, 7
        %s367 = smul.addr %s366, 4
        %s368 = scalar_lea.vmem %s0, %s367
        %p369 = pneg %p47
        %p370 = pneg %p44
        %s371 = smul.u32 4, %s26
        %p372 = scmp.lt.s32.totalorder %s371, 7
        %s373 = scalar_select %p372, %s371, 7
        %s374 = smul.addr %s373, 4
        %s375 = scalar_lea.vmem %s1, %s374
        %p376 = pneg %p73
        %p377 = pneg %p70
        %s378 = smul.u32 8, %s26
        %p379 = scmp.lt.s32.totalorder %s378, 15
        %s380 = scalar_select %p379, %s378, 15
        %s381 = smul.addr %s380, 4
        %s382 = scalar_lea.vmem %s2, %s381
        %p383 = pneg %p99
        %p384 = pneg %p96
        %p385 = pneg %p120
        %p386 = pneg %p117
        %p387 = pneg %p141
        %p388 = pneg %p138
        %p389 = pneg %p162
        %p390 = pneg %p159
        %p391 = pneg %p183
        %p392 = pneg %p180
        %p393 = pneg %p204
        %p394 = pneg %p201
        %p395 = pneg %p225
        %p396 = pneg %p222
        %p397 = pneg %p251
        %p398 = pneg %p248
        %s399 = sand.u32 %s238, 1
        %s400 = scalar_lea.sflag [#allocation4], %s399
        %s401 = sand.u32 %s238, 1
        %s402 = smul.addr %s401, 2
        %s403 = scalar_lea.vmem [#allocation5], %s402
        %p404 = pneg %p277
        %p405 = pneg %p274
        %s406 = smul.u32 8, %s26
        %p407 = scmp.lt.s32.totalorder %s406, 15
        %s408 = scalar_select %p407, %s406, 15
        %s409 = smul.addr %s408, 8
        %s410 = scalar_lea.vmem %s10, %s409
        %s411 = smul.u32 4, %s26
        %p412 = scmp.lt.s32.totalorder %s411, 7
        %s413 = scalar_select %p412, %s411, 7
        %s414 = smul.addr %s413, 4
        %s415 = scalar_lea.vmem %s0, %s414
        %s416 = smul.u32 4, %s26
        %s417 = smul.u32 4, %s26
        %p418 = scmp.lt.s32.totalorder %s417, 7
        %s419 = scalar_select %p418, %s417, 7
        %s420 = smul.addr %s419, 4
        %s421 = scalar_lea.vmem %s1, %s420
        %s422 = smul.u32 4, %s26
        %s423 = smul.u32 8, %s26
        %p424 = scmp.lt.s32.totalorder %s423, 15
        %s425 = scalar_select %p424, %s423, 15
        %s426 = smul.addr %s425, 4
        %s427 = scalar_lea.vmem %s2, %s426
        %s428 = smul.u32 8, %s26
        %s429 = smul.u32 8, %s26
        %p430 = scmp.lt.s32.totalorder %s429, 15
        %s431 = scalar_select %p430, %s429, 15
        %s432 = smul.addr %s431, 8
        %s433 = scalar_lea.vmem %s10, %s432
        %s434 = smul.u32 8, %s26
        %v436 = vld [vmem:[%s427] sm:$0xf]
        %v437 = vld [vmem:[%s427 + $0x4] sm:$0xf]
        %v438 = vld [vmem:[%s427 + $0x8] sm:$0xf]
        %v439 = vld [vmem:[%s427 + $0xc] sm:$0xf]
        %v440 = vld [vmem:[%s427 + $0x10] sm:$0xf]
        %v441 = vld [vmem:[%s427 + $0x14] sm:$0xf]
        %v442 = vld [vmem:[%s427 + $0x18] sm:$0xf]
        %v443 = vld [vmem:[%s427 + $0x1c] sm:$0xf]
        %v444 = vld [vmem:[%s8] sm:$0xf]
        %v453 = vunpack.c.l.b16 %v436
        %v454 = vunpack.c.l.b16 %v437
        %v455 = vunpack.c.l.b16 %v438
        %v456 = vunpack.c.l.b16 %v439
        %v457 = vunpack.c.l.b16 %v440
        %v458 = vunpack.c.l.b16 %v441
        %v459 = vunpack.c.l.b16 %v442
        %v460 = vunpack.c.l.b16 %v443
        %v461 = vpack.c.b16 %v454, %v453
        %v462 = vpack.c.b16 %v456, %v455
        %v463 = vpack.c.b16 %v458, %v457
        %v464 = vpack.c.b16 %v460, %v459
        %vm465 = vcmask 64512
        %v467 = vsel %vm465, %v461, 0
        %v470 = vsel %vm465, %v462, 0
        %v473 = vsel %vm465, %v463, 0
        %v476 = vsel %vm465, %v464, 0
        %vm478 = vcmask 1043456
        %v480 = vsel %vm478, %v444, 0
        %482 = vmatpush.bf16.msra.mxu0 0
        %483 = vmatpush.bf16.msra.mxu0 0
        %484 = vmatpush.bf16.msra.mxu0 0
        %485 = vmatpush.bf16.msra.mxu0 0
        %486 = vmatpush.bf16.msra.mxu0 0
        %487 = vmatpush.bf16.msra.mxu0 0
        %488 = vmatpush.bf16.msra.mxu0 0
        %489 = vmatpush.bf16.msra.mxu0 %v480
        %490 = vmatmul.bf16.gmra.mxu0 %v467
        %v491 = vpop.f32.mrf.mxu0
        %v492 = vadd.f32 0.0, %v491
        %v493 = vpop.f32.mrf.mxu0
        %v494 = vadd.f32 0.0, %v493
        %495 = vmatmul.bf16.gmra.mxu0 %v470
        %v496 = vpop.f32.mrf.mxu0
        %v497 = vadd.f32 0.0, %v496
        %v498 = vpop.f32.mrf.mxu0
        %v499 = vadd.f32 0.0, %v498
        %500 = vmatmul.bf16.gmra.mxu0 %v473
        %v501 = vpop.f32.mrf.mxu0
        %v502 = vadd.f32 0.0, %v501
        %v503 = vpop.f32.mrf.mxu0
        %v504 = vadd.f32 0.0, %v503
        %505 = vmatmul.bf16.gmra.mxu0 %v476
        %v506 = vpop.f32.mrf.mxu0
        %v507 = vadd.f32 0.0, %v506
        %v508 = vpop.f32.mrf.mxu0
        %v509 = vadd.f32 0.0, %v508
        %510 = vdwg.mxu0
        %vm511 = vcmask 523264
        %512 = vst.msk [vmem:[%s433] sm:$0xff] %vm511, %v492
        %513 = vst.msk [vmem:[%s433 + $0x8] sm:$0xff] %vm511, %v494
        %514 = vst.msk [vmem:[%s433 + $0x10] sm:$0xff] %vm511, %v497
        %515 = vst.msk [vmem:[%s433 + $0x18] sm:$0xff] %vm511, %v499
        %516 = vst.msk [vmem:[%s433 + $0x20] sm:$0xff] %vm511, %v502
        %517 = vst.msk [vmem:[%s433 + $0x28] sm:$0xff] %vm511, %v504
        %518 = vst.msk [vmem:[%s433 + $0x30] sm:$0xff] %vm511, %v507
        %519 = vst.msk [vmem:[%s433 + $0x38] sm:$0xff] %vm511, %v509
        %v520 = vld [vmem:[%s421] sm:$0xf]
        %v521 = vld [vmem:[%s421 + $0x4] sm:$0xf]
        %v522 = vld [vmem:[%s421 + $0x8] sm:$0xf]
        %v523 = vld [vmem:[%s421 + $0xc] sm:$0xf]
        %v524 = vld [vmem:[%s415] sm:$0xf]
        %v525 = vld [vmem:[%s415 + $0x4] sm:$0xf]
        %v526 = vld [vmem:[%s415 + $0x8] sm:$0xf]
        %v527 = vld [vmem:[%s415 + $0xc] sm:$0xf]
        %v528 = vld [vmem:[%s3] sm:$0xf]
        %v529 = vld [vmem:[%s3 + $0x4] sm:$0xf]
        %v530 = vld [vmem:[%s3 + $0x8] sm:$0xf]
        %v531 = vld [vmem:[%s3 + $0xc] sm:$0xf]
        %v532 = vld [vmem:[%s3 + $0x10] sm:$0xf]
        %v533 = vld [vmem:[%s3 + $0x14] sm:$0xf]
        %v534 = vld [vmem:[%s3 + $0x18] sm:$0xf]
        %v535 = vld [vmem:[%s3 + $0x1c] sm:$0xf]
        %v540 = vunpack.c.l.b16 %v524
        %v541 = vunpack.c.l.b16 %v525
        %v542 = vunpack.c.l.b16 %v526
        %v543 = vunpack.c.l.b16 %v527
        %v544 = vpack.c.b16 %v541, %v540
        %v545 = vpack.c.b16 %v543, %v542
        %v554 = vunpack.c.l.b16 %v528
        %v555 = vunpack.c.l.b16 %v529
        %v556 = vunpack.c.l.b16 %v530
        %v557 = vunpack.c.l.b16 %v531
        %v558 = vunpack.c.l.b16 %v532
        %v559 = vunpack.c.l.b16 %v533
        %v560 = vunpack.c.l.b16 %v534
        %v561 = vunpack.c.l.b16 %v535
        %v562 = vpack.c.b16 %v555, %v554
        %v563 = vpack.c.b16 %v557, %v556
        %v564 = vpack.c.b16 %v559, %v558
        %v565 = vpack.c.b16 %v561, %v560
        %v571 = vsel %vm511, %v544, 0
        %v574 = vsel %vm511, %v545, 0
        %576 = vmatpush.bf16.msra.mxu0 0
        %577 = vmatpush.bf16.msra.mxu0 0
        %578 = vmatpush.bf16.msra.mxu0 0
        %579 = vmatpush.bf16.msra.mxu0 0
        %580 = vmatpush.bf16.msra.mxu0 %v565
        %581 = vmatpush.bf16.msra.mxu0 %v564
        %582 = vmatpush.bf16.msra.mxu0 %v563
        %583 = vmatpush.bf16.msra.mxu0 %v562
        %584 = vmatmul.bf16.gmra.mxu0 %v571
        %v585 = vpop.f32.mrf.mxu0
        %v586 = vadd.f32 0.0, %v585
        %v587 = vpop.f32.mrf.mxu0
        %v588 = vadd.f32 0.0, %v587
        %589 = vmatmul.bf16.gmra.mxu0 %v574
        %v590 = vpop.f32.mrf.mxu0
        %v591 = vadd.f32 0.0, %v590
        %v592 = vpop.f32.mrf.mxu0
        %v593 = vadd.f32 0.0, %v592
        %594 = vdwg.mxu0
        %v595 = vpack.c.bf16 %v588, %v586
        %v596 = vpack.c.bf16 %v593, %v591
        %v601 = vunpack.c.l.b16 %v520
        %v602 = vunpack.c.l.b16 %v521
        %v603 = vunpack.c.l.b16 %v522
        %v604 = vunpack.c.l.b16 %v523
        %v605 = vpack.c.b16 %v602, %v601
        %v606 = vpack.c.b16 %v604, %v603
        %vm607 = vcmask 261120
        %v609 = vsel %vm607, %v605, 0
        %v612 = vsel %vm607, %v606, 0
        %614 = vmatpush.bf16.msra.mxu0 0
        %615 = vmatpush.bf16.msra.mxu0 0
        %616 = vmatpush.bf16.msra.mxu0 0
        %617 = vmatpush.bf16.msra.mxu0 0
        %618 = vmatpush.bf16.msra.mxu0 0
        %619 = vmatpush.bf16.msra.mxu0 0
        %620 = vmatpush.bf16.msra.mxu0 %v596
        %621 = vmatpush.bf16.msra.mxu0 %v595
        %622 = vmatmul.bf16.gmra.mxu0 %v609
        %v623 = vpop.f32.mrf.mxu0
        %v624 = vadd.f32 0.0, %v623
        %v625 = vpop.f32.mrf.mxu0
        %v626 = vadd.f32 0.0, %v625
        %627 = vmatmul.bf16.gmra.mxu0 %v612
        %v628 = vpop.f32.mrf.mxu0
        %v629 = vadd.f32 0.0, %v628
        %v630 = vpop.f32.mrf.mxu0
        %v631 = vadd.f32 0.0, %v630
        %632 = vdwg.mxu0
        %v633 = vpack.c.bf16 %v626, %v624
        %v634 = vpack.c.bf16 %v631, %v629
        %v635 = vld [vmem:[#allocation2] sm:$0xf]
        %v636 = vld [vmem:[#allocation2 + $0x4] sm:$0xf]
        %v637 = vld [vmem:[#allocation2 + $0x8] sm:$0xf]
        %v638 = vld [vmem:[#allocation2 + $0xc] sm:$0xf]
        %v639 = vld [vmem:[#allocation2 + $0x10] sm:$0xf]
        %v640 = vld [vmem:[#allocation2 + $0x14] sm:$0xf]
        %v641 = vld [vmem:[#allocation2 + $0x18] sm:$0xf]
        %v642 = vld [vmem:[#allocation2 + $0x1c] sm:$0xf]
        %v651 = vunpack.c.l.b16 %v635
        %v652 = vunpack.c.l.b16 %v636
        %v653 = vunpack.c.l.b16 %v637
        %v654 = vunpack.c.l.b16 %v638
        %v655 = vunpack.c.l.b16 %v639
        %v656 = vunpack.c.l.b16 %v640
        %v657 = vunpack.c.l.b16 %v641
        %v658 = vunpack.c.l.b16 %v642
        %v659 = vpack.c.b16 %v652, %v651
        %v660 = vpack.c.b16 %v654, %v653
        %v661 = vpack.c.b16 %v656, %v655
        %v662 = vpack.c.b16 %v658, %v657
        %v668 = vsel %vm511, %v633, 0
        %v671 = vsel %vm511, %v634, 0
        %673 = vmatpush.bf16.msra.mxu0 0
        %674 = vmatpush.bf16.msra.mxu0 0
        %675 = vmatpush.bf16.msra.mxu0 0
        %676 = vmatpush.bf16.msra.mxu0 0
        %677 = vmatpush.bf16.msra.mxu0 %v662
        %678 = vmatpush.bf16.msra.mxu0 %v661
        %679 = vmatpush.bf16.msra.mxu0 %v660
        %680 = vmatpush.bf16.msra.mxu0 %v659
        %681 = vmatmul.bf16.gmra.mxu0 %v668
        %v682 = vpop.f32.mrf.mxu0
        %v683 = vadd.f32 0.0, %v682
        %v684 = vpop.f32.mrf.mxu0
        %v685 = vadd.f32 0.0, %v684
        %686 = vmatmul.bf16.gmra.mxu0 %v671
        %v687 = vpop.f32.mrf.mxu0
        %v688 = vadd.f32 0.0, %v687
        %v689 = vpop.f32.mrf.mxu0
        %v690 = vadd.f32 0.0, %v689
        %691 = vdwg.mxu0
        %v692 = vmax.f32 %v683, 0.0
        %v693 = vmax.f32 %v685, 0.0
        %v694 = vmax.f32 %v688, 0.0
        %v695 = vmax.f32 %v690, 0.0
        %v696 = vadd.f32 %v692, %v586
        %v697 = vadd.f32 %v693, %v588
        %v698 = vadd.f32 %v694, %v591
        %v699 = vadd.f32 %v695, %v593
        %v700 = vsel %vm511, %v696, 0.0
        %701 = vadd.xlane.f32.xlu0 %v700
        %v702 = vpop.xlane.xlu0 %701
        %v703 = vsel %vm511, %v697, 0.0
        %704 = vadd.xlane.f32.xlu0 %v703
        %v705 = vpop.xlane.xlu0 %704
        %v706 = vsel %vm511, %v698, 0.0
        %707 = vadd.xlane.f32.xlu0 %v706
        %v708 = vpop.xlane.xlu0 %707
        %v709 = vsel %vm511, %v699, 0.0
        %710 = vadd.xlane.f32.xlu0 %v709
        %v711 = vpop.xlane.xlu0 %710
        %v712 = vmul.f32 %v702, 0.015625
        %v713 = vmul.f32 %v705, 0.015625
        %v714 = vmul.f32 %v708, 0.015625
        %v715 = vmul.f32 %v711, 0.015625
        %v716 = vsub.f32 %v696, %v712
        %v717 = vsub.f32 %v697, %v713
        %v718 = vsub.f32 %v698, %v714
        %v719 = vsub.f32 %v699, %v715
        %v720 = vmul.f32 %v716, %v716
        %v721 = vmul.f32 %v717, %v717
        %v722 = vmul.f32 %v718, %v718
        %v723 = vmul.f32 %v719, %v719
        %v724 = vsel %vm511, %v720, 0.0
        %725 = vadd.xlane.f32.xlu0 %v724
        %v726 = vpop.xlane.xlu0 %725
        %v727 = vsel %vm511, %v721, 0.0
        %728 = vadd.xlane.f32.xlu0 %v727
        %v729 = vpop.xlane.xlu0 %728
        %v730 = vsel %vm511, %v722, 0.0
        %731 = vadd.xlane.f32.xlu0 %v730
        %v732 = vpop.xlane.xlu0 %731
        %v733 = vsel %vm511, %v723, 0.0
        %734 = vadd.xlane.f32.xlu0 %v733
        %v735 = vpop.xlane.xlu0 %734
        %v736 = vmul.f32 %v726, 0.015625
        %v737 = vmul.f32 %v729, 0.015625
        %v738 = vmul.f32 %v732, 0.015625
        %v739 = vmul.f32 %v735, 0.015625
        %v740 = vadd.f32 %v736, 1e-05
        %v741 = vadd.f32 %v737, 1e-05
        %v742 = vadd.f32 %v738, 1e-05
        %v743 = vadd.f32 %v739, 1e-05
        %v744 = vrsqrt.pop %v740
        %v745 = vmul.f32 %v744, %v740
        %v746 = vmul.f32 %v745, %v744
        %v747 = vmul.f32 0.5, %v746
        %v748 = vsub.f32 1.5, %v747
        %v749 = vmul.f32 %v744, %v748
        %vm750 = vweird.f32 %v740
        %vm751 = vweird.f32 %v744
        %vm752 = vmor %vm750, %vm751
        %v753 = vsel %vm752, %v744, %v749
        %v754 = vrsqrt.pop %v741
        %v755 = vmul.f32 %v754, %v741
        %v756 = vmul.f32 %v755, %v754
        %v757 = vmul.f32 0.5, %v756
        %v758 = vsub.f32 1.5, %v757
        %v759 = vmul.f32 %v754, %v758
        %vm760 = vweird.f32 %v741
        %vm761 = vweird.f32 %v754
        %vm762 = vmor %vm760, %vm761
        %v763 = vsel %vm762, %v754, %v759
        %v764 = vrsqrt.pop %v742
        %v765 = vmul.f32 %v764, %v742
        %v766 = vmul.f32 %v765, %v764
        %v767 = vmul.f32 0.5, %v766
        %v768 = vsub.f32 1.5, %v767
        %v769 = vmul.f32 %v764, %v768
        %vm770 = vweird.f32 %v742
        %vm771 = vweird.f32 %v764
        %vm772 = vmor %vm770, %vm771
        %v773 = vsel %vm772, %v764, %v769
        %v774 = vrsqrt.pop %v743
        %v775 = vmul.f32 %v774, %v743
        %v776 = vmul.f32 %v775, %v774
        %v777 = vmul.f32 0.5, %v776
        %v778 = vsub.f32 1.5, %v777
        %v779 = vmul.f32 %v774, %v778
        %vm780 = vweird.f32 %v743
        %vm781 = vweird.f32 %v774
        %vm782 = vmor %vm780, %vm781
        %v783 = vsel %vm782, %v774, %v779
        %v784 = vmul.f32 %v716, %v753
        %v785 = vmul.f32 %v717, %v763
        %v786 = vmul.f32 %v718, %v773
        %v787 = vmul.f32 %v719, %v783
        %v788 = vld [vmem:[%s5] sm:$0x1]
        %v790 = vperm.slane %v788, 0
        %v792 = vmul.f32 %v784, %v790
        %v793 = vmul.f32 %v785, %v790
        %v794 = vmul.f32 %v786, %v790
        %v795 = vmul.f32 %v787, %v790
        %v796 = vld [vmem:[%s6] sm:$0x1]
        %v798 = vperm.slane %v796, 0
        %v800 = vadd.f32 %v792, %v798
        %v801 = vadd.f32 %v793, %v798
        %v802 = vadd.f32 %v794, %v798
        %v803 = vadd.f32 %v795, %v798
        %v804 = vpack.c.bf16 %v801, %v800
        %v805 = vpack.c.bf16 %v803, %v802
        %806 = vmatpush.bf16.msra.mxu0 0
        %807 = vmatpush.bf16.msra.mxu0 0
        %808 = vmatpush.bf16.msra.mxu0 0
        %809 = vmatpush.bf16.msra.mxu0 0
        %810 = vmatpush.bf16.msra.mxu0 0
        %811 = vmatpush.bf16.msra.mxu0 0
        %812 = vmatpush.bf16.msra.mxu0 %v805
        %813 = vmatpush.bf16.msra.mxu0 %v804
        %814 = vmatmul.bf16.gmra.mxu0 %v609
        %v815 = vpop.f32.mrf.mxu0
        %v816 = vadd.f32 0.0, %v815
        %v817 = vpop.f32.mrf.mxu0
        %v818 = vadd.f32 0.0, %v817
        %819 = vmatmul.bf16.gmra.mxu0 %v612
        %v820 = vpop.f32.mrf.mxu0
        %v821 = vadd.f32 0.0, %v820
        %v822 = vpop.f32.mrf.mxu0
        %v823 = vadd.f32 0.0, %v822
        %824 = vdwg.mxu0
        %v825 = vpack.c.bf16 %v818, %v816
        %v826 = vpack.c.bf16 %v823, %v821
        %s827 = scalar_lea.vmem [#allocation2], 32
        %v828 = vld [vmem:[%s827] sm:$0xf]
        %v829 = vld [vmem:[%s827 + $0x4] sm:$0xf]
        %v830 = vld [vmem:[%s827 + $0x8] sm:$0xf]
        %v831 = vld [vmem:[%s827 + $0xc] sm:$0xf]
        %v832 = vld [vmem:[%s827 + $0x10] sm:$0xf]
        %v833 = vld [vmem:[%s827 + $0x14] sm:$0xf]
        %v834 = vld [vmem:[%s827 + $0x18] sm:$0xf]
        %v835 = vld [vmem:[%s827 + $0x1c] sm:$0xf]
        %v844 = vunpack.c.l.b16 %v828
        %v845 = vunpack.c.l.b16 %v829
        %v846 = vunpack.c.l.b16 %v830
        %v847 = vunpack.c.l.b16 %v831
        %v848 = vunpack.c.l.b16 %v832
        %v849 = vunpack.c.l.b16 %v833
        %v850 = vunpack.c.l.b16 %v834
        %v851 = vunpack.c.l.b16 %v835
        %v852 = vpack.c.b16 %v845, %v844
        %v853 = vpack.c.b16 %v847, %v846
        %v854 = vpack.c.b16 %v849, %v848
        %v855 = vpack.c.b16 %v851, %v850
        %v861 = vsel %vm511, %v825, 0
        %v864 = vsel %vm511, %v826, 0
        %866 = vmatpush.bf16.msra.mxu0 0
        %867 = vmatpush.bf16.msra.mxu0 0
        %868 = vmatpush.bf16.msra.mxu0 0
        %869 = vmatpush.bf16.msra.mxu0 0
        %870 = vmatpush.bf16.msra.mxu0 %v855
        %871 = vmatpush.bf16.msra.mxu0 %v854
        %872 = vmatpush.bf16.msra.mxu0 %v853
        %873 = vmatpush.bf16.msra.mxu0 %v852
        %874 = vmatmul.bf16.gmra.mxu0 %v861
        %v875 = vpop.f32.mrf.mxu0
        %v876 = vadd.f32 0.0, %v875
        %v877 = vpop.f32.mrf.mxu0
        %v878 = vadd.f32 0.0, %v877
        %879 = vmatmul.bf16.gmra.mxu0 %v864
        %v880 = vpop.f32.mrf.mxu0
        %v881 = vadd.f32 0.0, %v880
        %v882 = vpop.f32.mrf.mxu0
        %v883 = vadd.f32 0.0, %v882
        %884 = vdwg.mxu0
        %v885 = vmax.f32 %v876, 0.0
        %v886 = vmax.f32 %v878, 0.0
        %v887 = vmax.f32 %v881, 0.0
        %v888 = vmax.f32 %v883, 0.0
        %v889 = vadd.f32 %v885, %v800
        %v890 = vadd.f32 %v886, %v801
        %v891 = vadd.f32 %v887, %v802
        %v892 = vadd.f32 %v888, %v803
        %v893 = vsel %vm511, %v889, 0.0
        %894 = vadd.xlane.f32.xlu0 %v893
        %v895 = vpop.xlane.xlu0 %894
        %v896 = vsel %vm511, %v890, 0.0
        %897 = vadd.xlane.f32.xlu0 %v896
        %v898 = vpop.xlane.xlu0 %897
        %v899 = vsel %vm511, %v891, 0.0
        %900 = vadd.xlane.f32.xlu0 %v899
        %v901 = vpop.xlane.xlu0 %900
        %v902 = vsel %vm511, %v892, 0.0
        %903 = vadd.xlane.f32.xlu0 %v902
        %v904 = vpop.xlane.xlu0 %903
        %v905 = vmul.f32 %v895, 0.015625
        %v906 = vmul.f32 %v898, 0.015625
        %v907 = vmul.f32 %v901, 0.015625
        %v908 = vmul.f32 %v904, 0.015625
        %v909 = vsub.f32 %v889, %v905
        %v910 = vsub.f32 %v890, %v906
        %v911 = vsub.f32 %v891, %v907
        %v912 = vsub.f32 %v892, %v908
        %v913 = vmul.f32 %v909, %v909
        %v914 = vmul.f32 %v910, %v910
        %v915 = vmul.f32 %v911, %v911
        %v916 = vmul.f32 %v912, %v912
        %v917 = vsel %vm511, %v913, 0.0
        %918 = vadd.xlane.f32.xlu0 %v917
        %v919 = vpop.xlane.xlu0 %918
        %v920 = vsel %vm511, %v914, 0.0
        %921 = vadd.xlane.f32.xlu0 %v920
        %v922 = vpop.xlane.xlu0 %921
        %v923 = vsel %vm511, %v915, 0.0
        %924 = vadd.xlane.f32.xlu0 %v923
        %v925 = vpop.xlane.xlu0 %924
        %v926 = vsel %vm511, %v916, 0.0
        %927 = vadd.xlane.f32.xlu0 %v926
        %v928 = vpop.xlane.xlu0 %927
        %v929 = vmul.f32 %v919, 0.015625
        %v930 = vmul.f32 %v922, 0.015625
        %v931 = vmul.f32 %v925, 0.015625
        %v932 = vmul.f32 %v928, 0.015625
        %v933 = vadd.f32 %v929, 1e-05
        %v934 = vadd.f32 %v930, 1e-05
        %v935 = vadd.f32 %v931, 1e-05
        %v936 = vadd.f32 %v932, 1e-05
        %v937 = vrsqrt.pop %v933
        %v938 = vmul.f32 %v937, %v933
        %v939 = vmul.f32 %v938, %v937
        %v940 = vmul.f32 0.5, %v939
        %v941 = vsub.f32 1.5, %v940
        %v942 = vmul.f32 %v937, %v941
        %vm943 = vweird.f32 %v933
        %vm944 = vweird.f32 %v937
        %vm945 = vmor %vm943, %vm944
        %v946 = vsel %vm945, %v937, %v942
        %v947 = vrsqrt.pop %v934
        %v948 = vmul.f32 %v947, %v934
        %v949 = vmul.f32 %v948, %v947
        %v950 = vmul.f32 0.5, %v949
        %v951 = vsub.f32 1.5, %v950
        %v952 = vmul.f32 %v947, %v951
        %vm953 = vweird.f32 %v934
        %vm954 = vweird.f32 %v947
        %vm955 = vmor %vm953, %vm954
        %v956 = vsel %vm955, %v947, %v952
        %v957 = vrsqrt.pop %v935
        %v958 = vmul.f32 %v957, %v935
        %v959 = vmul.f32 %v958, %v957
        %v960 = vmul.f32 0.5, %v959
        %v961 = vsub.f32 1.5, %v960
        %v962 = vmul.f32 %v957, %v961
        %vm963 = vweird.f32 %v935
        %vm964 = vweird.f32 %v957
        %vm965 = vmor %vm963, %vm964
        %v966 = vsel %vm965, %v957, %v962
        %v967 = vrsqrt.pop %v936
        %v968 = vmul.f32 %v967, %v936
        %v969 = vmul.f32 %v968, %v967
        %v970 = vmul.f32 0.5, %v969
        %v971 = vsub.f32 1.5, %v970
        %v972 = vmul.f32 %v967, %v971
        %vm973 = vweird.f32 %v936
        %vm974 = vweird.f32 %v967
        %vm975 = vmor %vm973, %vm974
        %v976 = vsel %vm975, %v967, %v972
        %v977 = vmul.f32 %v909, %v946
        %v978 = vmul.f32 %v910, %v956
        %v979 = vmul.f32 %v911, %v966
        %v980 = vmul.f32 %v912, %v976
        %s981 = scalar_lea.vmem %s5, 1
        %v982 = vld [vmem:[%s981] sm:$0x1]
        %v984 = vperm.slane %v982, 0
        %v986 = vmul.f32 %v977, %v984
        %v987 = vmul.f32 %v978, %v984
        %v988 = vmul.f32 %v979, %v984
        %v989 = vmul.f32 %v980, %v984
        %s990 = scalar_lea.vmem %s6, 1
        %v991 = vld [vmem:[%s990] sm:$0x1]
        %v993 = vperm.slane %v991, 0
        %v995 = vadd.f32 %v986, %v993
        %v996 = vadd.f32 %v987, %v993
        %v997 = vadd.f32 %v988, %v993
        %v998 = vadd.f32 %v989, %v993
        %v999 = vpack.c.bf16 %v996, %v995
        %v1000 = vpack.c.bf16 %v998, %v997
        %1001 = vmatpush.bf16.msra.mxu0 0
        %1002 = vmatpush.bf16.msra.mxu0 0
        %1003 = vmatpush.bf16.msra.mxu0 0
        %1004 = vmatpush.bf16.msra.mxu0 0
        %1005 = vmatpush.bf16.msra.mxu0 0
        %1006 = vmatpush.bf16.msra.mxu0 0
        %1007 = vmatpush.bf16.msra.mxu0 %v1000
        %1008 = vmatpush.bf16.msra.mxu0 %v999
        %1009 = vmatmul.bf16.gmra.mxu0 %v609
        %v1010 = vpop.f32.mrf.mxu0
        %v1011 = vadd.f32 0.0, %v1010
        %v1012 = vpop.f32.mrf.mxu0
        %v1013 = vadd.f32 0.0, %v1012
        %1014 = vmatmul.bf16.gmra.mxu0 %v612
        %v1015 = vpop.f32.mrf.mxu0
        %v1016 = vadd.f32 0.0, %v1015
        %v1017 = vpop.f32.mrf.mxu0
        %v1018 = vadd.f32 0.0, %v1017
        %1019 = vdwg.mxu0
        %v1020 = vpack.c.bf16 %v1013, %v1011
        %v1021 = vpack.c.bf16 %v1018, %v1016
        %s1022 = scalar_lea.vmem [#allocation2], 64
        %v1023 = vld [vmem:[%s1022] sm:$0xf]
        %v1024 = vld [vmem:[%s1022 + $0x4] sm:$0xf]
        %v1025 = vld [vmem:[%s1022 + $0x8] sm:$0xf]
        %v1026 = vld [vmem:[%s1022 + $0xc] sm:$0xf]
        %v1027 = vld [vmem:[%s1022 + $0x10] sm:$0xf]
        %v1028 = vld [vmem:[%s1022 + $0x14] sm:$0xf]
        %v1029 = vld [vmem:[%s1022 + $0x18] sm:$0xf]
        %v1030 = vld [vmem:[%s1022 + $0x1c] sm:$0xf]
        %v1039 = vunpack.c.l.b16 %v1023
        %v1040 = vunpack.c.l.b16 %v1024
        %v1041 = vunpack.c.l.b16 %v1025
        %v1042 = vunpack.c.l.b16 %v1026
        %v1043 = vunpack.c.l.b16 %v1027
        %v1044 = vunpack.c.l.b16 %v1028
        %v1045 = vunpack.c.l.b16 %v1029
        %v1046 = vunpack.c.l.b16 %v1030
        %v1047 = vpack.c.b16 %v1040, %v1039
        %v1048 = vpack.c.b16 %v1042, %v1041
        %v1049 = vpack.c.b16 %v1044, %v1043
        %v1050 = vpack.c.b16 %v1046, %v1045
        %v1056 = vsel %vm511, %v1020, 0
        %v1059 = vsel %vm511, %v1021, 0
        %1061 = vmatpush.bf16.msra.mxu0 0
        %1062 = vmatpush.bf16.msra.mxu0 0
        %1063 = vmatpush.bf16.msra.mxu0 0
        %1064 = vmatpush.bf16.msra.mxu0 0
        %1065 = vmatpush.bf16.msra.mxu0 %v1050
        %1066 = vmatpush.bf16.msra.mxu0 %v1049
        %1067 = vmatpush.bf16.msra.mxu0 %v1048
        %1068 = vmatpush.bf16.msra.mxu0 %v1047
        %1069 = vmatmul.bf16.gmra.mxu0 %v1056
        %v1070 = vpop.f32.mrf.mxu0
        %v1071 = vadd.f32 0.0, %v1070
        %v1072 = vpop.f32.mrf.mxu0
        %v1073 = vadd.f32 0.0, %v1072
        %1074 = vmatmul.bf16.gmra.mxu0 %v1059
        %v1075 = vpop.f32.mrf.mxu0
        %v1076 = vadd.f32 0.0, %v1075
        %v1077 = vpop.f32.mrf.mxu0
        %v1078 = vadd.f32 0.0, %v1077
        %1079 = vdwg.mxu0
        %v1080 = vmax.f32 %v1071, 0.0
        %v1081 = vmax.f32 %v1073, 0.0
        %v1082 = vmax.f32 %v1076, 0.0
        %v1083 = vmax.f32 %v1078, 0.0
        %v1084 = vadd.f32 %v1080, %v995
        %v1085 = vadd.f32 %v1081, %v996
        %v1086 = vadd.f32 %v1082, %v997
        %v1087 = vadd.f32 %v1083, %v998
        %v1088 = vsel %vm511, %v1084, 0.0
        %1089 = vadd.xlane.f32.xlu0 %v1088
        %v1090 = vpop.xlane.xlu0 %1089
        %v1091 = vsel %vm511, %v1085, 0.0
        %1092 = vadd.xlane.f32.xlu0 %v1091
        %v1093 = vpop.xlane.xlu0 %1092
        %v1094 = vsel %vm511, %v1086, 0.0
        %1095 = vadd.xlane.f32.xlu0 %v1094
        %v1096 = vpop.xlane.xlu0 %1095
        %v1097 = vsel %vm511, %v1087, 0.0
        %1098 = vadd.xlane.f32.xlu0 %v1097
        %v1099 = vpop.xlane.xlu0 %1098
        %v1100 = vmul.f32 %v1090, 0.015625
        %v1101 = vmul.f32 %v1093, 0.015625
        %v1102 = vmul.f32 %v1096, 0.015625
        %v1103 = vmul.f32 %v1099, 0.015625
        %v1104 = vsub.f32 %v1084, %v1100
        %v1105 = vsub.f32 %v1085, %v1101
        %v1106 = vsub.f32 %v1086, %v1102
        %v1107 = vsub.f32 %v1087, %v1103
        %v1108 = vmul.f32 %v1104, %v1104
        %v1109 = vmul.f32 %v1105, %v1105
        %v1110 = vmul.f32 %v1106, %v1106
        %v1111 = vmul.f32 %v1107, %v1107
        %v1112 = vsel %vm511, %v1108, 0.0
        %1113 = vadd.xlane.f32.xlu0 %v1112
        %v1114 = vpop.xlane.xlu0 %1113
        %v1115 = vsel %vm511, %v1109, 0.0
        %1116 = vadd.xlane.f32.xlu0 %v1115
        %v1117 = vpop.xlane.xlu0 %1116
        %v1118 = vsel %vm511, %v1110, 0.0
        %1119 = vadd.xlane.f32.xlu0 %v1118
        %v1120 = vpop.xlane.xlu0 %1119
        %v1121 = vsel %vm511, %v1111, 0.0
        %1122 = vadd.xlane.f32.xlu0 %v1121
        %v1123 = vpop.xlane.xlu0 %1122
        %v1124 = vmul.f32 %v1114, 0.015625
        %v1125 = vmul.f32 %v1117, 0.015625
        %v1126 = vmul.f32 %v1120, 0.015625
        %v1127 = vmul.f32 %v1123, 0.015625
        %v1128 = vadd.f32 %v1124, 1e-05
        %v1129 = vadd.f32 %v1125, 1e-05
        %v1130 = vadd.f32 %v1126, 1e-05
        %v1131 = vadd.f32 %v1127, 1e-05
        %v1132 = vrsqrt.pop %v1128
        %v1133 = vmul.f32 %v1132, %v1128
        %v1134 = vmul.f32 %v1133, %v1132
        %v1135 = vmul.f32 0.5, %v1134
        %v1136 = vsub.f32 1.5, %v1135
        %v1137 = vmul.f32 %v1132, %v1136
        %vm1138 = vweird.f32 %v1128
        %vm1139 = vweird.f32 %v1132
        %vm1140 = vmor %vm1138, %vm1139
        %v1141 = vsel %vm1140, %v1132, %v1137
        %v1142 = vrsqrt.pop %v1129
        %v1143 = vmul.f32 %v1142, %v1129
        %v1144 = vmul.f32 %v1143, %v1142
        %v1145 = vmul.f32 0.5, %v1144
        %v1146 = vsub.f32 1.5, %v1145
        %v1147 = vmul.f32 %v1142, %v1146
        %vm1148 = vweird.f32 %v1129
        %vm1149 = vweird.f32 %v1142
        %vm1150 = vmor %vm1148, %vm1149
        %v1151 = vsel %vm1150, %v1142, %v1147
        %v1152 = vrsqrt.pop %v1130
        %v1153 = vmul.f32 %v1152, %v1130
        %v1154 = vmul.f32 %v1153, %v1152
        %v1155 = vmul.f32 0.5, %v1154
        %v1156 = vsub.f32 1.5, %v1155
        %v1157 = vmul.f32 %v1152, %v1156
        %vm1158 = vweird.f32 %v1130
        %vm1159 = vweird.f32 %v1152
        %vm1160 = vmor %vm1158, %vm1159
        %v1161 = vsel %vm1160, %v1152, %v1157
        %v1162 = vrsqrt.pop %v1131
        %v1163 = vmul.f32 %v1162, %v1131
        %v1164 = vmul.f32 %v1163, %v1162
        %v1165 = vmul.f32 0.5, %v1164
        %v1166 = vsub.f32 1.5, %v1165
        %v1167 = vmul.f32 %v1162, %v1166
        %vm1168 = vweird.f32 %v1131
        %vm1169 = vweird.f32 %v1162
        %vm1170 = vmor %vm1168, %vm1169
        %v1171 = vsel %vm1170, %v1162, %v1167
        %v1172 = vmul.f32 %v1104, %v1141
        %v1173 = vmul.f32 %v1105, %v1151
        %v1174 = vmul.f32 %v1106, %v1161
        %v1175 = vmul.f32 %v1107, %v1171
        %s1176 = scalar_lea.vmem %s5, 2
        %v1177 = vld [vmem:[%s1176] sm:$0x1]
        %v1179 = vperm.slane %v1177, 0
        %v1181 = vmul.f32 %v1172, %v1179
        %v1182 = vmul.f32 %v1173, %v1179
        %v1183 = vmul.f32 %v1174, %v1179
        %v1184 = vmul.f32 %v1175, %v1179
        %s1185 = scalar_lea.vmem %s6, 2
        %v1186 = vld [vmem:[%s1185] sm:$0x1]
        %v1188 = vperm.slane %v1186, 0
        %v1190 = vadd.f32 %v1181, %v1188
        %v1191 = vadd.f32 %v1182, %v1188
        %v1192 = vadd.f32 %v1183, %v1188
        %v1193 = vadd.f32 %v1184, %v1188
        %v1194 = vpack.c.bf16 %v1191, %v1190
        %v1195 = vpack.c.bf16 %v1193, %v1192
        %1196 = vmatpush.bf16.msra.mxu0 0
        %1197 = vmatpush.bf16.msra.mxu0 0
        %1198 = vmatpush.bf16.msra.mxu0 0
        %1199 = vmatpush.bf16.msra.mxu0 0
        %1200 = vmatpush.bf16.msra.mxu0 0
        %1201 = vmatpush.bf16.msra.mxu0 0
        %1202 = vmatpush.bf16.msra.mxu0 %v1195
        %1203 = vmatpush.bf16.msra.mxu0 %v1194
        %1204 = vmatmul.bf16.gmra.mxu0 %v609
        %v1205 = vpop.f32.mrf.mxu0
        %v1206 = vadd.f32 0.0, %v1205
        %v1207 = vpop.f32.mrf.mxu0
        %v1208 = vadd.f32 0.0, %v1207
        %1209 = vmatmul.bf16.gmra.mxu0 %v612
        %v1210 = vpop.f32.mrf.mxu0
        %v1211 = vadd.f32 0.0, %v1210
        %v1212 = vpop.f32.mrf.mxu0
        %v1213 = vadd.f32 0.0, %v1212
        %1214 = vdwg.mxu0
        %v1215 = vpack.c.bf16 %v1208, %v1206
        %v1216 = vpack.c.bf16 %v1213, %v1211
        %s1217 = scalar_lea.vmem [#allocation2], 96
        %v1218 = vld [vmem:[%s1217] sm:$0xf]
        %v1219 = vld [vmem:[%s1217 + $0x4] sm:$0xf]
        %v1220 = vld [vmem:[%s1217 + $0x8] sm:$0xf]
        %v1221 = vld [vmem:[%s1217 + $0xc] sm:$0xf]
        %v1222 = vld [vmem:[%s1217 + $0x10] sm:$0xf]
        %v1223 = vld [vmem:[%s1217 + $0x14] sm:$0xf]
        %v1224 = vld [vmem:[%s1217 + $0x18] sm:$0xf]
        %v1225 = vld [vmem:[%s1217 + $0x1c] sm:$0xf]
        %v1234 = vunpack.c.l.b16 %v1218
        %v1235 = vunpack.c.l.b16 %v1219
        %v1236 = vunpack.c.l.b16 %v1220
        %v1237 = vunpack.c.l.b16 %v1221
        %v1238 = vunpack.c.l.b16 %v1222
        %v1239 = vunpack.c.l.b16 %v1223
        %v1240 = vunpack.c.l.b16 %v1224
        %v1241 = vunpack.c.l.b16 %v1225
        %v1242 = vpack.c.b16 %v1235, %v1234
        %v1243 = vpack.c.b16 %v1237, %v1236
        %v1244 = vpack.c.b16 %v1239, %v1238
        %v1245 = vpack.c.b16 %v1241, %v1240
        %v1251 = vsel %vm511, %v1215, 0
        %v1254 = vsel %vm511, %v1216, 0
        %1256 = vmatpush.bf16.msra.mxu0 0
        %1257 = vmatpush.bf16.msra.mxu0 0
        %1258 = vmatpush.bf16.msra.mxu0 0
        %1259 = vmatpush.bf16.msra.mxu0 0
        %1260 = vmatpush.bf16.msra.mxu0 %v1245
        %1261 = vmatpush.bf16.msra.mxu0 %v1244
        %1262 = vmatpush.bf16.msra.mxu0 %v1243
        %1263 = vmatpush.bf16.msra.mxu0 %v1242
        %1264 = vmatmul.bf16.gmra.mxu0 %v1251
        %v1265 = vpop.f32.mrf.mxu0
        %v1266 = vadd.f32 0.0, %v1265
        %v1267 = vpop.f32.mrf.mxu0
        %v1268 = vadd.f32 0.0, %v1267
        %1269 = vmatmul.bf16.gmra.mxu0 %v1254
        %v1270 = vpop.f32.mrf.mxu0
        %v1271 = vadd.f32 0.0, %v1270
        %v1272 = vpop.f32.mrf.mxu0
        %v1273 = vadd.f32 0.0, %v1272
        %1274 = vdwg.mxu0
        %v1275 = vmax.f32 %v1266, 0.0
        %v1276 = vmax.f32 %v1268, 0.0
        %v1277 = vmax.f32 %v1271, 0.0
        %v1278 = vmax.f32 %v1273, 0.0
        %v1279 = vadd.f32 %v1275, %v1190
        %v1280 = vadd.f32 %v1276, %v1191
        %v1281 = vadd.f32 %v1277, %v1192
        %v1282 = vadd.f32 %v1278, %v1193
        %v1283 = vsel %vm511, %v1279, 0.0
        %1284 = vadd.xlane.f32.xlu0 %v1283
        %v1285 = vpop.xlane.xlu0 %1284
        %v1286 = vsel %vm511, %v1280, 0.0
        %1287 = vadd.xlane.f32.xlu0 %v1286
        %v1288 = vpop.xlane.xlu0 %1287
        %v1289 = vsel %vm511, %v1281, 0.0
        %1290 = vadd.xlane.f32.xlu0 %v1289
        %v1291 = vpop.xlane.xlu0 %1290
        %v1292 = vsel %vm511, %v1282, 0.0
        %1293 = vadd.xlane.f32.xlu0 %v1292
        %v1294 = vpop.xlane.xlu0 %1293
        %v1295 = vmul.f32 %v1285, 0.015625
        %v1296 = vmul.f32 %v1288, 0.015625
        %v1297 = vmul.f32 %v1291, 0.015625
        %v1298 = vmul.f32 %v1294, 0.015625
        %v1299 = vsub.f32 %v1279, %v1295
        %v1300 = vsub.f32 %v1280, %v1296
        %v1301 = vsub.f32 %v1281, %v1297
        %v1302 = vsub.f32 %v1282, %v1298
        %v1303 = vmul.f32 %v1299, %v1299
        %v1304 = vmul.f32 %v1300, %v1300
        %v1305 = vmul.f32 %v1301, %v1301
        %v1306 = vmul.f32 %v1302, %v1302
        %v1307 = vsel %vm511, %v1303, 0.0
        %1308 = vadd.xlane.f32.xlu0 %v1307
        %v1309 = vpop.xlane.xlu0 %1308
        %v1310 = vsel %vm511, %v1304, 0.0
        %1311 = vadd.xlane.f32.xlu0 %v1310
        %v1312 = vpop.xlane.xlu0 %1311
        %v1313 = vsel %vm511, %v1305, 0.0
        %1314 = vadd.xlane.f32.xlu0 %v1313
        %v1315 = vpop.xlane.xlu0 %1314
        %v1316 = vsel %vm511, %v1306, 0.0
        %1317 = vadd.xlane.f32.xlu0 %v1316
        %v1318 = vpop.xlane.xlu0 %1317
        %v1319 = vmul.f32 %v1309, 0.015625
        %v1320 = vmul.f32 %v1312, 0.015625
        %v1321 = vmul.f32 %v1315, 0.015625
        %v1322 = vmul.f32 %v1318, 0.015625
        %v1323 = vadd.f32 %v1319, 1e-05
        %v1324 = vadd.f32 %v1320, 1e-05
        %v1325 = vadd.f32 %v1321, 1e-05
        %v1326 = vadd.f32 %v1322, 1e-05
        %v1327 = vrsqrt.pop %v1323
        %v1328 = vmul.f32 %v1327, %v1323
        %v1329 = vmul.f32 %v1328, %v1327
        %v1330 = vmul.f32 0.5, %v1329
        %v1331 = vsub.f32 1.5, %v1330
        %v1332 = vmul.f32 %v1327, %v1331
        %vm1333 = vweird.f32 %v1323
        %vm1334 = vweird.f32 %v1327
        %vm1335 = vmor %vm1333, %vm1334
        %v1336 = vsel %vm1335, %v1327, %v1332
        %v1337 = vrsqrt.pop %v1324
        %v1338 = vmul.f32 %v1337, %v1324
        %v1339 = vmul.f32 %v1338, %v1337
        %v1340 = vmul.f32 0.5, %v1339
        %v1341 = vsub.f32 1.5, %v1340
        %v1342 = vmul.f32 %v1337, %v1341
        %vm1343 = vweird.f32 %v1324
        %vm1344 = vweird.f32 %v1337
        %vm1345 = vmor %vm1343, %vm1344
        %v1346 = vsel %vm1345, %v1337, %v1342
        %v1347 = vrsqrt.pop %v1325
        %v1348 = vmul.f32 %v1347, %v1325
        %v1349 = vmul.f32 %v1348, %v1347
        %v1350 = vmul.f32 0.5, %v1349
        %v1351 = vsub.f32 1.5, %v1350
        %v1352 = vmul.f32 %v1347, %v1351
        %vm1353 = vweird.f32 %v1325
        %vm1354 = vweird.f32 %v1347
        %vm1355 = vmor %vm1353, %vm1354
        %v1356 = vsel %vm1355, %v1347, %v1352
        %v1357 = vrsqrt.pop %v1326
        %v1358 = vmul.f32 %v1357, %v1326
        %v1359 = vmul.f32 %v1358, %v1357
        %v1360 = vmul.f32 0.5, %v1359
        %v1361 = vsub.f32 1.5, %v1360
        %v1362 = vmul.f32 %v1357, %v1361
        %vm1363 = vweird.f32 %v1326
        %vm1364 = vweird.f32 %v1357
        %vm1365 = vmor %vm1363, %vm1364
        %v1366 = vsel %vm1365, %v1357, %v1362
        %v1367 = vmul.f32 %v1299, %v1336
        %v1368 = vmul.f32 %v1300, %v1346
        %v1369 = vmul.f32 %v1301, %v1356
        %v1370 = vmul.f32 %v1302, %v1366
        %s1371 = scalar_lea.vmem %s5, 3
        %v1372 = vld [vmem:[%s1371] sm:$0x1]
        %v1374 = vperm.slane %v1372, 0
        %v1376 = vmul.f32 %v1367, %v1374
        %v1377 = vmul.f32 %v1368, %v1374
        %v1378 = vmul.f32 %v1369, %v1374
        %v1379 = vmul.f32 %v1370, %v1374
        %s1380 = scalar_lea.vmem %s6, 3
        %v1381 = vld [vmem:[%s1380] sm:$0x1]
        %v1383 = vperm.slane %v1381, 0
        %v1385 = vadd.f32 %v1376, %v1383
        %v1386 = vadd.f32 %v1377, %v1383
        %v1387 = vadd.f32 %v1378, %v1383
        %v1388 = vadd.f32 %v1379, %v1383
        %v1389 = vsel %vm511, %v1385, 0.0
        %v1390 = vsel %vm511, %v1386, 0.0
        %v1391 = vadd.f32 %v1389, %v1390
        %v1392 = vrot.slane %v1391, 4
        %v1393 = vadd.f32 %v1391, %v1392
        %v1394 = vrot.slane %v1393, 2
        %v1395 = vadd.f32 %v1393, %v1394
        %v1396 = vrot.slane %v1395, 1
        %v1397 = vadd.f32 %v1395, %v1396
        %v1398 = vsel %vm511, %v1387, 0.0
        %v1399 = vsel %vm511, %v1388, 0.0
        %v1400 = vadd.f32 %v1398, %v1399
        %v1401 = vrot.slane %v1400, 4
        %v1402 = vadd.f32 %v1400, %v1401
        %v1403 = vrot.slane %v1402, 2
        %v1404 = vadd.f32 %v1402, %v1403
        %v1405 = vrot.slane %v1404, 1
        %v1406 = vadd.f32 %v1404, %v1405
        %vm1407 = vcmask 1040384
        %v1408 = vsel %vm1407, %v1397, %v1406
        %v1409 = vld [vmem:[%s7] sm:$0x1]
        %v1411 = vperm.slane %v1409, 0
        %v1413 = vmul.f32 %v1408, %v1411
        %vm1414 = vcmask 517120
        %v1415 = vsel %vm1414, %v1413, 0.0
        %1416 = vadd.xlane.f32.xlu0 %v1415
        %v1417 = vpop.xlane.xlu0 %1416
        %v1418 = vxor.u32 %v1417, 2147483648
        %v1419 = vmul.f32 %v1418, 1.442695
        %v1420 = vpow.pop %v1419
        %v1421 = vadd.f32 %v1420, 1.0
        %v1422 = vrcp.pop %v1421
        %v1423 = vmul.f32 %v1421, %v1422
        %v1424 = vsub.f32 1.0, %v1423
        %v1425 = vmul.f32 %v1422, %v1424
        %v1426 = vadd.f32 %v1422, %v1425
        %vm1427 = vweird.f32 %v1421
        %vm1428 = vweird.f32 %v1422
        %vm1429 = vmor %vm1427, %vm1428
        %v1430 = vsel %vm1429, %v1422, %v1426
        %v1431 = vand.u32 2147483647, %v1421
        %vm1432 = vcmp.eq.f32.partialorder %v1431, 8.507059e+37
        %v1433 = vand.u32 %v1421, 2147483648
        %v1434 = vor.u32 1.1754944e-38, %v1433
        %v1435 = vsel %vm1432, %v1434, %v1430
        %v1436 = vmul.f32 1.0, %v1435
        %1437 = vst [vmem:[%s403] sm:$0x3] %v1436
        %s1438 = sand.u32 %s238, 1
        %s1439 = scalar_lea.sflag [#allocation4], %s1438
        %s1440 = sand.u32 %s238, 1
        %s1441 = smul.addr %s1440, 2
        %s1442 = scalar_lea.vmem [#allocation5], %s1441
        %s1443 = smul.u32 8, %s26
        %p1444 = scmp.lt.s32.totalorder %s1443, 15
        %s1445 = scalar_select %p1444, %s1443, 15
        %s1446 = smul.addr %s1445, 8
        %s1447 = scalar_lea.vmem %s10, %s1446
        // Predicated region
        $region61: #{tpu_custom_call.1} parent=55 // pred_check
          %p1448 = pneg %p248
        $region62: #{tpu_custom_call.1} parent=55 // pred_check_branch
          %1450 = sbr.rel (%p1448) target = $region64
        $region63: #{tpu_custom_call.1} parent=55 // pred_region
          %1452 = vsyncadd %s1439, 0
          %s1453 = smul.addr %s26, 2
          %s1454 = scalar_lea.hbm %s9, %s1453
          %s1456 = sshll.u32 %s1442, 4
          %s1457 = int_to_ptr.vmem [resolvable:$true] %s1456
          %s1458 = sshll.u32 %s1454, 4
          %s1459 = int_to_ptr.hbm [resolvable:$true] %s1458
          %1461 = dma.vmem_to_hbm [thread:$0]  %s1457, 32, %s1459, %s1439
        $region64: #{tpu_custom_call.1} parent=55 // pred_fallthru
          _
        // Predicated region
        $region65: #{tpu_custom_call.1} parent=55 // pred_check
          %p1462 = pneg %p274
        $region66: #{tpu_custom_call.1} parent=55 // pred_check_branch
          %1464 = sbr.rel (%p1462) target = $region68
        $region67: #{tpu_custom_call.1} parent=55 // pred_region
          %s1465 = smul.u32 8, %s26
        $region68: #{tpu_custom_call.1} parent=55 // pred_fallthru
          _
      $region56: #{tpu_custom_call.1} parent=5 // pred_fallthru
        _
      %p1466 = scmp.le.s32.totalorder 2, %s21
      // Predicated region
      $region69: #{tpu_custom_call.1} parent=5 // pred_check
        %p1467 = pneg %p1466
      $region70: #{tpu_custom_call.1} parent=5 // pred_check_branch
        %1469 = sbr.rel (%p1467) target = $region72
      $region71: #{tpu_custom_call.1} parent=5 // pred_region
        %s1470 = ssub.s32 %s21, 2
        // Predicated region
        $region73: #{tpu_custom_call.1} parent=71 // pred_check
          %p1471 = pneg %p254
        $region74: #{tpu_custom_call.1} parent=71 // pred_check_branch
          %1473 = sbr.rel (%p1471) target = $region76
        $region75: #{tpu_custom_call.1} parent=71 // pred_region
          %s1474 = sand.u32 %s239, 1
          %s1475 = scalar_lea.sflag [#allocation4], %s1474
          %s1476 = sand.u32 %s239, 1
          %s1477 = smul.addr %s1476, 2
          %s1478 = scalar_lea.vmem [#allocation5], %s1477
          %1480 = dma.done %s1475, 32
        $region76: #{tpu_custom_call.1} parent=71 // pred_fallthru
          _
        // Predicated region
        $region77: #{tpu_custom_call.1} parent=71 // pred_check
          %p1481 = pneg %p280
        $region78: #{tpu_custom_call.1} parent=71 // pred_check_branch
          %1483 = sbr.rel (%p1481) target = $region80
        $region79: #{tpu_custom_call.1} parent=71 // pred_region
          %s1484 = smul.u32 8, %s27
          %p1485 = scmp.lt.s32.totalorder %s1484, 15
          %s1486 = scalar_select %p1485, %s1484, 15
          %s1487 = smul.addr %s1486, 8
          %s1488 = scalar_lea.vmem %s10, %s1487
        $region80: #{tpu_custom_call.1} parent=71 // pred_fallthru
          _
      $region72: #{tpu_custom_call.1} parent=5 // pred_fallthru
        _
    $region6: #{tpu_custom_call.1} parent=1 // loop_footer
      %s25 = sadd.s32 1, %s21
    $region7: #{tpu_custom_call.1} parent=1 // loop_footer_branch
      %20 = sbr.rel target = $region3
    $region8: #{tpu_custom_call.1} parent=1 // loop_exit
      _
    %1489 = vsyncpa [#allocation3], 1
    %s1490 = scalar_lea.sflag [#allocation3], 1
    %1491 = vsyncpa %s1490, 1
    %1492 = vsyncpa [#allocation4], 1
    %s1493 = scalar_lea.sflag [#allocation4], 1
    %1494 = vsyncpa %s1493, 1

</llo_original>
